<compile_context>
chip_gen: v6e
topology: v6e:2x2x1
jax: 0.10.0
libtpu: 0.0.40
codegen_flags: <defaults>
</compile_context>

<pallas_src>
import jax
import jax.numpy as jnp
from jax import lax
from jax.experimental import pallas as pl
from jax.experimental.pallas import tpu as pltpu


D_IN = 768
H1 = 256
H2 = 256
H3 = 128
D_OUT = 1
BIAS_LEN = 2 * H1 + H2 + H3 + D_OUT  # 897

# Max batch-tile rows (multiple of 128). 1024 amortizes per-step overhead on
# v6e and is safe on v7x / v5e together with the VMEM limit below.
MAX_TM = 1024
VMEM_LIMIT_BYTES = 48 * 1024 * 1024  # < 64 MiB (v7x physical), < 128 MiB (v5e/v6e)


def _mlp_kernel(code_ref, desc_ref,
                w1c_ref, w1d_ref, w2_ref, w3_ref, w4t_ref, b_ref,
                out_ref):
    # Activations in bf16 for the MXU; accumulate in f32.
    code = code_ref[...].astype(jnp.bfloat16)
    desc = desc_ref[...].astype(jnp.bfloat16)

    # Packed biases (f32): [b1c | b1d | b2 | b3 | b4], lane-aligned offsets.
    b1c = b_ref[:, 0:H1]
    b1d = b_ref[:, H1:2 * H1]
    b2 = b_ref[:, 2 * H1:2 * H1 + H2]
    b3 = b_ref[:, 2 * H1 + H2:2 * H1 + H2 + H3]
    b4 = b_ref[:, 2 * H1 + H2 + H3:BIAS_LEN]           # (1, 1)

    # Branch 1: fc1_code + ReLU
    h_code = jnp.dot(code, w1c_ref[...], preferred_element_type=jnp.float32)
    h_code = jnp.maximum(h_code + b1c, 0.0).astype(jnp.bfloat16)

    # Branch 2: fc1_desc + ReLU
    h_desc = jnp.dot(desc, w1d_ref[...], preferred_element_type=jnp.float32)
    h_desc = jnp.maximum(h_desc + b1d, 0.0).astype(jnp.bfloat16)

    # fc2 on concat([h_code, h_desc], 1) == h_code @ W2[:256] + h_desc @ W2[256:]
    h2 = jnp.dot(h_code, w2_ref[0:H1, :], preferred_element_type=jnp.float32)
    h2 = h2 + jnp.dot(h_desc, w2_ref[H1:2 * H1, :],
                      preferred_element_type=jnp.float32)
    h2 = jnp.maximum(h2 + b2, 0.0).astype(jnp.bfloat16)

    # fc3 + ReLU
    h3 = jnp.dot(h2, w3_ref[...], preferred_element_type=jnp.float32)
    h3 = jnp.maximum(h3 + b3, 0.0).astype(jnp.bfloat16)

    # fc4 as a lane-dense (1, TM) MXU matmul: (1, H3) contracted with (TM, H3),
    # instead of a (TM, 1) result (masked stores + per-row XLU reduce).
    out_t = lax.dot_general(w4t_ref[...], h3,
                            dimension_numbers=(((1,), (1,)), ((), ())),
                            preferred_element_type=jnp.float32)    # (1, TM)
    out_ref[...] = (out_t + b4).astype(out_ref.dtype)


def _round_up(x, m):
    return ((x + m - 1) // m) * m


def _choose_tm(batch):
    """Batch-tile rows.

    * B <= 256: one grid step, block equals full batch (satisfies the
      (8,128) rule via 'equal to full dim').
    * B > 256: 128-aligned tiles sized so the grid has >= 2 steps (keeps
      both v7x TensorCores busy; no-op on v5e/v6e), capped at MAX_TM.
    """
    if batch <= 256:
        return batch
    return min(MAX_TM, _round_up(pl.cdiv(batch, 2), 128))


def _resident(arr):
    """Whole-array block, constant block index => stays resident in VMEM.

    Single-buffered (pipeline_mode=pl.Buffered(1)) where the installed
    Pallas supports it; falls back to the default otherwise.
    """
    idx_map = lambda i: (0,) * arr.ndim
    try:
        return pl.BlockSpec(arr.shape, idx_map, pipeline_mode=pl.Buffered(1))
    except (TypeError, AttributeError):
        return pl.BlockSpec(arr.shape, idx_map)


@jax.jit
def function_classifier(code_emb, desc_emb, params):
    """Forward pass. code_emb / desc_emb: anything that flattens to (-1, 768).

    Prefer bf16 activations at the call boundary (with resident weights the
    activation stream is essentially all of the HBM traffic).
    """
    code = code_emb.reshape(-1, D_IN)
    desc = desc_emb.reshape(-1, D_IN)
    B = code.shape[0]
    w1c, w1d, w2, w3, w4t, biases = params
    weight_arrays = (w1c, w1d, w2, w3, w4t, biases)

    TM = _choose_tm(B)
    n_tiles = pl.cdiv(B, TM)

    act_spec = pl.BlockSpec((TM, D_IN), lambda i: (i, 0))
    # Lane-dense output slab: tile i writes columns [i*TM, (i+1)*TM).
    out_spec = pl.BlockSpec((1, TM), lambda i: (0, i))

    flops = 2 * B * (2 * D_IN * H1 + (2 * H1) * H2 + H2 * H3 + H3 * D_OUT)
    bytes_accessed = int(
        code.size * code.dtype.itemsize
        + desc.size * desc.dtype.itemsize
        + sum(w.size * w.dtype.itemsize for w in weight_arrays)
        + B * D_OUT * 4)

    out_padded = pl.pallas_call(
        _mlp_kernel,
        out_shape=jax.ShapeDtypeStruct((1, n_tiles * TM), jnp.float32),
        grid_spec=pltpu.PrefetchScalarGridSpec(
            num_scalar_prefetch=0,
            grid=(n_tiles,),
            in_specs=[act_spec, act_spec] + [_resident(w) for w in weight_arrays],
            out_specs=out_spec,
        ),
        compiler_params=pltpu.CompilerParams(
            dimension_semantics=("parallel",),
            vmem_limit_bytes=VMEM_LIMIT_BYTES),
        cost_estimate=pl.CostEstimate(
            flops=flops, transcendentals=0, bytes_accessed=bytes_accessed),
    )(code, desc, *weight_arrays)

    # Padded columns of a ragged last tile hold garbage; slice back to B rows.
    return out_padded[0, :B].reshape(B, D_OUT)


def init_params(key):
    """PyTorch-style init U(-1/sqrt(fan_in), 1/sqrt(fan_in)); weights stored
    as (in, out) bf16, biases packed into one (1, 897) f32 array."""
    def linear(k, fan_in, fan_out):
        kw, kb = jax.random.split(k)
        bound = 1.0 / (fan_in ** 0.5)
        w = jax.random.uniform(kw, (fan_in, fan_out), jnp.float32, -bound, bound)
        b = jax.random.uniform(kb, (fan_out,), jnp.float32, -bound, bound)
        return w, b

    k1, k2, k3, k4, k5 = jax.random.split(key, 5)
    w1c, b1c = linear(k1, D_IN, H1)      # fc1_code
    w1d, b1d = linear(k2, D_IN, H1)      # fc1_desc
    w2, b2 = linear(k3, 2 * H1, H2)      # fc2 (acts on concat of branches)
    w3, b3 = linear(k4, H2, H3)          # fc3
    w4, b4 = linear(k5, H3, D_OUT)       # fc4

    biases = jnp.concatenate([b1c, b1d, b2, b3, b4])[None, :]   # (1, 897) f32
    return (w1c.astype(jnp.bfloat16),
            w1d.astype(jnp.bfloat16),
            w2.astype(jnp.bfloat16),
            w3.astype(jnp.bfloat16),
            w4.T.astype(jnp.bfloat16),   # (1, 128)
            biases)


def _reference(code_emb, desc_emb, params):
    """Matched-precision JAX reference (bf16 weights/activations, f32 accum)."""
    w1c, w1d, w2, w3, w4t, biases = params
    b1c = biases[:, 0:H1]
    b1d = biases[:, H1:2 * H1]
    b2 = biases[:, 2 * H1:2 * H1 + H2]
    b3 = biases[:, 2 * H1 + H2:2 * H1 + H2 + H3]
    b4 = biases[:, 2 * H1 + H2 + H3:BIAS_LEN]

    code = code_emb.reshape(-1, D_IN).astype(jnp.bfloat16)
    desc = desc_emb.reshape(-1, D_IN).astype(jnp.bfloat16)

    hc = jax.nn.relu(
        jnp.dot(code, w1c, preferred_element_type=jnp.float32) + b1c
    ).astype(jnp.bfloat16)
    hd = jax.nn.relu(
        jnp.dot(desc, w1d, preferred_element_type=jnp.float32) + b1d
    ).astype(jnp.bfloat16)
    combined = jnp.concatenate([hc, hd], axis=1)
    x = jax.nn.relu(
        jnp.dot(combined, w2, preferred_element_type=jnp.float32) + b2
    ).astype(jnp.bfloat16)
    x = jax.nn.relu(
        jnp.dot(x, w3, preferred_element_type=jnp.float32) + b3
    ).astype(jnp.bfloat16)
    out = lax.dot_general(x, w4t,
                          dimension_numbers=(((1,), (1,)), ((), ())),
                          preferred_element_type=jnp.float32) + b4   # (B, 1)
    return out


if __name__ == "__main__":
    key = jax.random.PRNGKey(0)
    kp, kc, kd = jax.random.split(key, 3)
    params = init_params(kp)

    # Small-batch check (single grid step, whole-batch tile).
    B = 8
    code_emb = jax.random.normal(kc, (B, D_IN), jnp.bfloat16)
    desc_emb = jax.random.normal(kd, (B, D_IN), jnp.bfloat16)
    out = jax.block_until_ready(function_classifier(code_emb, desc_emb, params))
    ref = _reference(code_emb, desc_emb, params)
    assert out.shape == (B, D_OUT), out.shape
    assert jnp.allclose(out, ref, atol=1e-2, rtol=1e-2), (out, ref)

    # Multi-tile check: TM=512 -> 2 grid steps with a ragged last tile,
    # exercising the padded lane-dense output + wrapper slicing.
    B2 = 1000
    code2 = jax.random.normal(kc, (B2, D_IN), jnp.bfloat16)
    desc2 = jax.random.normal(kd, (B2, D_IN), jnp.bfloat16)
    out2 = jax.block_until_ready(function_classifier(code2, desc2, params))
    ref2 = _reference(code2, desc2, params)
    assert out2.shape == (B2, D_OUT), out2.shape
    assert jnp.allclose(out2, ref2, atol=1e-2, rtol=1e-2)

    print("KERNEL_OK")
</pallas_src>

<mosaic_0001>
module attributes {stable_mosaic.version = 11 : i64} {
  func.func @_mlp_kernel(%arg0: i32, %arg1: memref<8x768xbf16, #tpu.memory_space<vmem>>, %arg2: memref<8x768xbf16, #tpu.memory_space<vmem>>, %arg3: memref<768x256xbf16, #tpu.memory_space<vmem>>, %arg4: memref<768x256xbf16, #tpu.memory_space<vmem>>, %arg5: memref<512x256xbf16, #tpu.memory_space<vmem>>, %arg6: memref<256x128xbf16, #tpu.memory_space<vmem>>, %arg7: memref<1x128xbf16, #tpu.memory_space<vmem>>, %arg8: memref<1x897xf32, #tpu.memory_space<vmem>>, %arg9: memref<1x8xf32, #tpu.memory_space<vmem>>) attributes {dimension_semantics = [#tpu.dimension_semantics<parallel>], iteration_bounds = array<i64: 1>, scalar_prefetch = 0 : i64, scratch_operands = 0 : i64, tpu.core_type = #tpu.core_type<tc>, window_params = [{transform_indices = @transform_0, window_bounds = array<i64: 8, 768>}, {transform_indices = @transform_1, window_bounds = array<i64: 8, 768>}, {pipeline_mode = #tpu.pipeline_mode<synchronous>, transform_indices = @transform_2, window_bounds = array<i64: 768, 256>}, {pipeline_mode = #tpu.pipeline_mode<synchronous>, transform_indices = @transform_3, window_bounds = array<i64: 768, 256>}, {pipeline_mode = #tpu.pipeline_mode<synchronous>, transform_indices = @transform_4, window_bounds = array<i64: 512, 256>}, {pipeline_mode = #tpu.pipeline_mode<synchronous>, transform_indices = @transform_5, window_bounds = array<i64: 256, 128>}, {pipeline_mode = #tpu.pipeline_mode<synchronous>, transform_indices = @transform_6, window_bounds = array<i64: 1, 128>}, {pipeline_mode = #tpu.pipeline_mode<synchronous>, transform_indices = @transform_7, window_bounds = array<i64: 1, 897>}, {transform_indices = @transform_8, window_bounds = array<i64: 1, 8>}]} {
    %c0 = arith.constant 0 : index
    %c0_0 = arith.constant 0 : index
    %0 = vector.load %arg1[%c0, %c0_0] : memref<8x768xbf16, #tpu.memory_space<vmem>>, vector<8x768xbf16>
    %c0_1 = arith.constant 0 : index
    %c0_2 = arith.constant 0 : index
    %1 = vector.load %arg2[%c0_1, %c0_2] : memref<8x768xbf16, #tpu.memory_space<vmem>>, vector<8x768xbf16>
    %c0_3 = arith.constant 0 : index
    %c0_4 = arith.constant 0 : index
    %2 = vector.load %arg8[%c0_3, %c0_4] : memref<1x897xf32, #tpu.memory_space<vmem>>, vector<1x256xf32>
    %c0_5 = arith.constant 0 : index
    %c256 = arith.constant 256 : index
    %3 = vector.load %arg8[%c0_5, %c256] : memref<1x897xf32, #tpu.memory_space<vmem>>, vector<1x256xf32>
    %c0_6 = arith.constant 0 : index
    %c512 = arith.constant 512 : index
    %4 = vector.load %arg8[%c0_6, %c512] : memref<1x897xf32, #tpu.memory_space<vmem>>, vector<1x256xf32>
    %c0_7 = arith.constant 0 : index
    %c768 = arith.constant 768 : index
    %5 = vector.load %arg8[%c0_7, %c768] : memref<1x897xf32, #tpu.memory_space<vmem>>, vector<1x128xf32>
    %c0_8 = arith.constant 0 : index
    %c896 = arith.constant 896 : index
    %6 = vector.load %arg8[%c0_8, %c896] : memref<1x897xf32, #tpu.memory_space<vmem>>, vector<1x1xf32>
    %c0_9 = arith.constant 0 : index
    %c0_10 = arith.constant 0 : index
    %7 = vector.load %arg3[%c0_9, %c0_10] : memref<768x256xbf16, #tpu.memory_space<vmem>>, vector<768x256xbf16>
    %cst = arith.constant dense<0.000000e+00> : vector<8x256xf32>
    %8 = tpu.matmul %0, %7, %cst {dimension_numbers = #tpu.dot_dimension_numbers<[1], [0], [0], [1], [0, 0, 1, 1], [], []>} : vector<8x768xbf16>, vector<768x256xbf16>, vector<8x256xf32> -> vector<8x256xf32>
    %9 = vector.broadcast %2 : vector<1x256xf32> to vector<8x256xf32>
    %10 = arith.addf %8, %9 : vector<8x256xf32>
    %cst_11 = arith.constant 0.000000e+00 : f32
    %11 = vector.broadcast %cst_11 : f32 to vector<8x256xf32>
    %12 = arith.maximumf %10, %11 : vector<8x256xf32>
    %13 = arith.truncf %12 : vector<8x256xf32> to vector<8x256xbf16>
    %c0_12 = arith.constant 0 : index
    %c0_13 = arith.constant 0 : index
    %14 = vector.load %arg4[%c0_12, %c0_13] : memref<768x256xbf16, #tpu.memory_space<vmem>>, vector<768x256xbf16>
    %cst_14 = arith.constant dense<0.000000e+00> : vector<8x256xf32>
    %15 = tpu.matmul %1, %14, %cst_14 {dimension_numbers = #tpu.dot_dimension_numbers<[1], [0], [0], [1], [0, 0, 1, 1], [], []>} : vector<8x768xbf16>, vector<768x256xbf16>, vector<8x256xf32> -> vector<8x256xf32>
    %16 = vector.broadcast %3 : vector<1x256xf32> to vector<8x256xf32>
    %17 = arith.addf %15, %16 : vector<8x256xf32>
    %cst_15 = arith.constant 0.000000e+00 : f32
    %18 = vector.broadcast %cst_15 : f32 to vector<8x256xf32>
    %19 = arith.maximumf %17, %18 : vector<8x256xf32>
    %20 = arith.truncf %19 : vector<8x256xf32> to vector<8x256xbf16>
    %c0_16 = arith.constant 0 : index
    %c0_17 = arith.constant 0 : index
    %21 = vector.load %arg5[%c0_16, %c0_17] : memref<512x256xbf16, #tpu.memory_space<vmem>>, vector<256x256xbf16>
    %cst_18 = arith.constant dense<0.000000e+00> : vector<8x256xf32>
    %22 = tpu.matmul %13, %21, %cst_18 {dimension_numbers = #tpu.dot_dimension_numbers<[1], [0], [0], [1], [0, 0, 1, 1], [], []>} : vector<8x256xbf16>, vector<256x256xbf16>, vector<8x256xf32> -> vector<8x256xf32>
    %c256_19 = arith.constant 256 : index
    %c0_20 = arith.constant 0 : index
    %23 = vector.load %arg5[%c256_19, %c0_20] : memref<512x256xbf16, #tpu.memory_space<vmem>>, vector<256x256xbf16>
    %cst_21 = arith.constant dense<0.000000e+00> : vector<8x256xf32>
    %24 = tpu.matmul %20, %23, %cst_21 {dimension_numbers = #tpu.dot_dimension_numbers<[1], [0], [0], [1], [0, 0, 1, 1], [], []>} : vector<8x256xbf16>, vector<256x256xbf16>, vector<8x256xf32> -> vector<8x256xf32>
    %25 = arith.addf %22, %24 : vector<8x256xf32>
    %26 = vector.broadcast %4 : vector<1x256xf32> to vector<8x256xf32>
    %27 = arith.addf %25, %26 : vector<8x256xf32>
    %cst_22 = arith.constant 0.000000e+00 : f32
    %28 = vector.broadcast %cst_22 : f32 to vector<8x256xf32>
    %29 = arith.maximumf %27, %28 : vector<8x256xf32>
    %30 = arith.truncf %29 : vector<8x256xf32> to vector<8x256xbf16>
    %c0_23 = arith.constant 0 : index
    %c0_24 = arith.constant 0 : index
    %31 = vector.load %arg6[%c0_23, %c0_24] : memref<256x128xbf16, #tpu.memory_space<vmem>>, vector<256x128xbf16>
    %cst_25 = arith.constant dense<0.000000e+00> : vector<8x128xf32>
    %32 = tpu.matmul %30, %31, %cst_25 {dimension_numbers = #tpu.dot_dimension_numbers<[1], [0], [0], [1], [0, 0, 1, 1], [], []>} : vector<8x256xbf16>, vector<256x128xbf16>, vector<8x128xf32> -> vector<8x128xf32>
    %33 = vector.broadcast %5 : vector<1x128xf32> to vector<8x128xf32>
    %34 = arith.addf %32, %33 : vector<8x128xf32>
    %cst_26 = arith.constant 0.000000e+00 : f32
    %35 = vector.broadcast %cst_26 : f32 to vector<8x128xf32>
    %36 = arith.maximumf %34, %35 : vector<8x128xf32>
    %37 = arith.truncf %36 : vector<8x128xf32> to vector<8x128xbf16>
    %c0_27 = arith.constant 0 : index
    %c0_28 = arith.constant 0 : index
    %38 = vector.load %arg7[%c0_27, %c0_28] : memref<1x128xbf16, #tpu.memory_space<vmem>>, vector<1x128xbf16>
    %cst_29 = arith.constant dense<0.000000e+00> : vector<1x8xf32>
    %39 = tpu.matmul %38, %37, %cst_29 {dimension_numbers = #tpu.dot_dimension_numbers<[1], [1], [0], [0], [0, 0, 1, 0], [], []>} : vector<1x128xbf16>, vector<8x128xbf16>, vector<1x8xf32> -> vector<1x8xf32>
    %40 = vector.broadcast %6 : vector<1x1xf32> to vector<1x8xf32>
    %41 = arith.addf %39, %40 : vector<1x8xf32>
    %c0_30 = arith.constant 0 : index
    %c0_31 = arith.constant 0 : index
    %42 = vector.load %arg9[%c0_30, %c0_31] : memref<1x8xf32, #tpu.memory_space<vmem>>, vector<1x8xf32>
    tpu.vector_store %arg9[%c0_30, %c0_31], %41 {strides = array<i32>} : memref<1x8xf32, #tpu.memory_space<vmem>>, vector<1x8xf32>,
    return
  }
  func.func @transform_0(%arg0: i32) -> (i32, i32) {
    %c0_i32 = arith.constant 0 : i32
    %c0_i32_0 = arith.constant 0 : i32
    return %arg0, %c0_i32 : i32, i32
  }
  func.func @transform_1(%arg0: i32) -> (i32, i32) {
    %c0_i32 = arith.constant 0 : i32
    %c0_i32_0 = arith.constant 0 : i32
    return %arg0, %c0_i32 : i32, i32
  }
  func.func @transform_2(%arg0: i32) -> (i32, i32) {
    %c0_i32 = arith.constant 0 : i32
    %c0_i32_0 = arith.constant 0 : i32
    %c0_i32_1 = arith.constant 0 : i32
    return %c0_i32, %c0_i32_0 : i32, i32
  }
  func.func @transform_3(%arg0: i32) -> (i32, i32) {
    %c0_i32 = arith.constant 0 : i32
    %c0_i32_0 = arith.constant 0 : i32
    %c0_i32_1 = arith.constant 0 : i32
    return %c0_i32, %c0_i32_0 : i32, i32
  }
  func.func @transform_4(%arg0: i32) -> (i32, i32) {
    %c0_i32 = arith.constant 0 : i32
    %c0_i32_0 = arith.constant 0 : i32
    %c0_i32_1 = arith.constant 0 : i32
    return %c0_i32, %c0_i32_0 : i32, i32
  }
  func.func @transform_5(%arg0: i32) -> (i32, i32) {
    %c0_i32 = arith.constant 0 : i32
    %c0_i32_0 = arith.constant 0 : i32
    %c0_i32_1 = arith.constant 0 : i32
    return %c0_i32, %c0_i32_0 : i32, i32
  }
  func.func @transform_6(%arg0: i32) -> (i32, i32) {
    %c0_i32 = arith.constant 0 : i32
    %c0_i32_0 = arith.constant 0 : i32
    %c0_i32_1 = arith.constant 0 : i32
    return %c0_i32, %c0_i32_0 : i32, i32
  }
  func.func @transform_7(%arg0: i32) -> (i32, i32) {
    %c0_i32 = arith.constant 0 : i32
    %c0_i32_0 = arith.constant 0 : i32
    %c0_i32_1 = arith.constant 0 : i32
    return %c0_i32, %c0_i32_0 : i32, i32
  }
  func.func @transform_8(%arg0: i32) -> (i32, i32) {
    %c0_i32 = arith.constant 0 : i32
    %c0_i32_0 = arith.constant 0 : i32
    return %c0_i32, %arg0 : i32, i32
  }
}

</mosaic_0001>

<llo_original>
// kernel: function_classifier.1
$region0: #{function_classifier.1}
  #allocation0 [shape = 'u32[]', space=smem, size = 0x4, offset = 0x4, fixed_abs, tag = 'smem constant byte address 0x4 - core index']
  #allocation1 [shape = 'u32[144,128]{1,0:T(1,128)}', space=vmem, size = 0x12000, scoped, tag = 'internal scratch']
  %s0 = inlined_call_operand.hbm [shape: bf16[8,768], index: 0, kind: input, shape index: {}]
  %s1 = inlined_call_operand.hbm [shape: bf16[8,768], index: 1, kind: input, shape index: {}]
  %s2 = inlined_call_operand.hbm [shape: bf16[768,256], index: 2, kind: input, shape index: {}]
  %s3 = inlined_call_operand.hbm [shape: bf16[768,256], index: 3, kind: input, shape index: {}]
  %s4 = inlined_call_operand.hbm [shape: bf16[512,256], index: 4, kind: input, shape index: {}]
  %s5 = inlined_call_operand.hbm [shape: bf16[256,128], index: 5, kind: input, shape index: {}]
  %s6 = inlined_call_operand.vmem [shape: bf16[1,128], index: 6, kind: input, shape index: {}]
  %s7 = inlined_call_operand.vmem [shape: f32[1,897], index: 7, kind: input, shape index: {}]
  %s8 = inlined_call_operand.hbm [shape: f32[1,8], index: 8, kind: output, shape index: {}]
  %s9 = sld [smem:[#allocation0]]
  $region66: #{function_classifier.1} parent=0
    _
  %s11 = ssub.s32 1, %s9
  %s12 = scalar_select 0, %s11, %s9
  $region1: #{function_classifier.1} parent=0
    #allocation2 [shape = 'u8[12288]{0}', space=vmem, size = 0x3000, scoped, tag = 'input window, operand 0, single buffered']
    #allocation3 [shape = 's32[1]{0}', space=sflag, size = 0x4, scoped, tag = 'scoped memory for function_classifier.1']
    #allocation4 [shape = 's32[1]{0}', space=sflag, size = 0x4, scoped, tag = 'scoped memory for function_classifier.1']
    #allocation5 [shape = 'u8[12288]{0}', space=vmem, size = 0x3000, scoped, tag = 'input window, operand 1, single buffered']
    #allocation6 [shape = 's32[1]{0}', space=sflag, size = 0x4, scoped, tag = 'scoped memory for function_classifier.1']
    #allocation7 [shape = 'u8[393216]{0}', space=vmem, size = 0x60000, scoped, tag = 'input window, operand 2, single buffered']
    #allocation8 [shape = 'u8[393216]{0}', space=vmem, size = 0x60000, scoped, tag = 'input window, operand 3, single buffered']
    #allocation9 [shape = 's32[1]{0}', space=sflag, size = 0x4, scoped, tag = 'scoped memory for function_classifier.1']
    #allocation10 [shape = 'u8[262144]{0}', space=vmem, size = 0x40000, scoped, tag = 'input window, operand 4, single buffered']
    #allocation11 [shape = 'u8[65536]{0}', space=vmem, size = 0x10000, scoped, tag = 'input window, operand 5, single buffered']
    #allocation12 [shape = 's32[1]{0}', space=sflag, size = 0x4, scoped, tag = 'scoped memory for function_classifier.1']
    #allocation13 [shape = 'u8[512]{0}', space=vmem, size = 0x400, scoped, tag = 'output window, operand 0, single buffered']
    %13 = vsyncpa [#allocation3], 0
    %14 = vsyncpa [#allocation6], 0
    %15 = vsyncpa [#allocation9], 0
    %16 = vsyncpa [#allocation12], 0
    %17 = vsyncpa [#allocation4], 0
    // Predicated region
    $region2: #{function_classifier.1} parent=1 // pred_check
      _
    $region3: #{function_classifier.1} parent=1 // pred_check_branch
      %19 = sbr.rel (0) target = $region5
    $region4: #{function_classifier.1} parent=1 // pred_region
      %s21 = ssub.s32 384, 384
      %22 = vsyncadd [#allocation3], %s21
      %s24 = sshll.u32 [#allocation2], 4
      %s25 = int_to_ptr.vmem [resolvable:$true] %s24
      %27 = dma.hbm_to_vmem [thread:$0]  %s0, 384, %s25, [#allocation3]
    $region5: #{function_classifier.1} parent=1 // pred_fallthru
      _
    // Predicated region
    $region6: #{function_classifier.1} parent=1 // pred_check
      _
    $region7: #{function_classifier.1} parent=1 // pred_check_branch
      %29 = sbr.rel (0) target = $region9
    $region8: #{function_classifier.1} parent=1 // pred_region
      %s31 = ssub.s32 384, 384
      %32 = vsyncadd [#allocation6], %s31
      %s34 = sshll.u32 [#allocation5], 4
      %s35 = int_to_ptr.vmem [resolvable:$true] %s34
      %37 = dma.hbm_to_vmem [thread:$0]  %s1, 384, %s35, [#allocation6]
    $region9: #{function_classifier.1} parent=1 // pred_fallthru
      _
    // Predicated region
    $region10: #{function_classifier.1} parent=1 // pred_check
      _
    $region11: #{function_classifier.1} parent=1 // pred_check_branch
      %39 = sbr.rel (0) target = $region13
    $region12: #{function_classifier.1} parent=1 // pred_region
      %s41 = ssub.s32 12288, 12288
      %42 = vsyncadd [#allocation6], %s41
      %s43 = sshll.u32 [#allocation7], 4
      %s44 = int_to_ptr.vmem [resolvable:$true] %s43
      %49 = dma.hbm_to_vmem [thread:$0]  %s2, 12288, %s44, [#allocation6], 128, 128, 8
    $region13: #{function_classifier.1} parent=1 // pred_fallthru
      _
    // Predicated region
    $region14: #{function_classifier.1} parent=1 // pred_check
      _
    $region15: #{function_classifier.1} parent=1 // pred_check_branch
      %51 = sbr.rel (0) target = $region17
    $region16: #{function_classifier.1} parent=1 // pred_region
      %s53 = ssub.s32 12288, 12288
      %54 = vsyncadd [#allocation9], %s53
      %s55 = sshll.u32 [#allocation8], 4
      %s56 = int_to_ptr.vmem [resolvable:$true] %s55
      %61 = dma.hbm_to_vmem [thread:$0]  %s3, 12288, %s56, [#allocation9], 128, 128, 8
    $region17: #{function_classifier.1} parent=1 // pred_fallthru
      _
    // Predicated region
    $region18: #{function_classifier.1} parent=1 // pred_check
      _
    $region19: #{function_classifier.1} parent=1 // pred_check_branch
      %63 = sbr.rel (0) target = $region21
    $region20: #{function_classifier.1} parent=1 // pred_region
      %s65 = ssub.s32 8192, 8192
      %66 = vsyncadd [#allocation9], %s65
      %s67 = sshll.u32 [#allocation10], 4
      %s68 = int_to_ptr.vmem [resolvable:$true] %s67
      %73 = dma.hbm_to_vmem [thread:$0]  %s4, 8192, %s68, [#allocation9], 128, 128, 8
    $region21: #{function_classifier.1} parent=1 // pred_fallthru
      _
    // Predicated region
    $region22: #{function_classifier.1} parent=1 // pred_check
      _
    $region23: #{function_classifier.1} parent=1 // pred_check_branch
      %75 = sbr.rel (0) target = $region25
    $region24: #{function_classifier.1} parent=1 // pred_region
      %s77 = ssub.s32 2048, 2048
      %78 = vsyncadd [#allocation12], %s77
      %s79 = sshll.u32 [#allocation11], 4
      %s80 = int_to_ptr.vmem [resolvable:$true] %s79
      %85 = dma.hbm_to_vmem [thread:$0]  %s5, 2048, %s80, [#allocation12], 64, 64, 4
    $region25: #{function_classifier.1} parent=1 // pred_fallthru
      _
    // Predicated region
    $region26: #{function_classifier.1} parent=1 // pred_check
      _
    $region27: #{function_classifier.1} parent=1 // pred_check_branch
      %87 = sbr.rel (0) target = $region29
    $region28: #{function_classifier.1} parent=1 // pred_region
      _
    $region29: #{function_classifier.1} parent=1 // pred_fallthru
      _
    // Predicated region
    $region30: #{function_classifier.1} parent=1 // pred_check
      _
    $region31: #{function_classifier.1} parent=1 // pred_check_branch
      %89 = sbr.rel (0) target = $region33
    $region32: #{function_classifier.1} parent=1 // pred_region
      _
    $region33: #{function_classifier.1} parent=1 // pred_fallthru
      _
    // Predicated region
    $region34: #{function_classifier.1} parent=1 // pred_check
      _
    $region35: #{function_classifier.1} parent=1 // pred_check_branch
      %91 = sbr.rel (0) target = $region37
    $region36: #{function_classifier.1} parent=1 // pred_region
      %92 = dma.done [#allocation3], 384
    $region37: #{function_classifier.1} parent=1 // pred_fallthru
      _
    // Predicated region
    $region38: #{function_classifier.1} parent=1 // pred_check
      _
    $region39: #{function_classifier.1} parent=1 // pred_check_branch
      %94 = sbr.rel (0) target = $region41
    $region40: #{function_classifier.1} parent=1 // pred_region
      %95 = dma.done [#allocation6], 384
    $region41: #{function_classifier.1} parent=1 // pred_fallthru
      _
    // Predicated region
    $region42: #{function_classifier.1} parent=1 // pred_check
      _
    $region43: #{function_classifier.1} parent=1 // pred_check_branch
      %97 = sbr.rel (0) target = $region45
    $region44: #{function_classifier.1} parent=1 // pred_region
      %98 = dma.done [#allocation6], 12288
    $region45: #{function_classifier.1} parent=1 // pred_fallthru
      _
    // Predicated region
    $region46: #{function_classifier.1} parent=1 // pred_check
      _
    $region47: #{function_classifier.1} parent=1 // pred_check_branch
      %100 = sbr.rel (0) target = $region49
    $region48: #{function_classifier.1} parent=1 // pred_region
      %101 = dma.done [#allocation9], 12288
    $region49: #{function_classifier.1} parent=1 // pred_fallthru
      _
    // Predicated region
    $region50: #{function_classifier.1} parent=1 // pred_check
      _
    $region51: #{function_classifier.1} parent=1 // pred_check_branch
      %103 = sbr.rel (0) target = $region53
    $region52: #{function_classifier.1} parent=1 // pred_region
      %104 = dma.done [#allocation9], 8192
    $region53: #{function_classifier.1} parent=1 // pred_fallthru
      _
    // Predicated region
    $region54: #{function_classifier.1} parent=1 // pred_check
      _
    $region55: #{function_classifier.1} parent=1 // pred_check_branch
      %106 = sbr.rel (0) target = $region57
    $region56: #{function_classifier.1} parent=1 // pred_region
      %107 = dma.done [#allocation12], 2048
    $region57: #{function_classifier.1} parent=1 // pred_fallthru
      _
    %v109 = vld [vmem:[#allocation2] sm:$0xff]
    %v110 = vld [vmem:[#allocation2 + $0x8] sm:$0xff]
    %v111 = vld [vmem:[#allocation2 + $0x10] sm:$0xff]
    %v112 = vld [vmem:[#allocation5] sm:$0xff]
    %v113 = vld [vmem:[#allocation5 + $0x8] sm:$0xff]
    %v114 = vld [vmem:[#allocation5 + $0x10] sm:$0xff]
    %v115 = vld [vmem:[%s7] sm:$0x3]
    %v116 = vld [vmem:[%s7 + $0x2] sm:$0x3]
    %v117 = vld [vmem:[%s7 + $0x4] sm:$0x3]
    %v118 = vld [vmem:[%s7 + $0x6] sm:$0x1]
    %v119 = vld [vmem:[%s7 + $0x7] sm:$0x1]
    %v120 = vld [vmem:[#allocation7] sm:$0xff]
    %v121 = vld [vmem:[#allocation7 + $0x8] sm:$0xff]
    %v122 = vld [vmem:[#allocation7 + $0x10] sm:$0xff]
    %v123 = vld [vmem:[#allocation7 + $0x18] sm:$0xff]
    %v124 = vld [vmem:[#allocation7 + $0x20] sm:$0xff]
    %v125 = vld [vmem:[#allocation7 + $0x28] sm:$0xff]
    %v126 = vld [vmem:[#allocation7 + $0x30] sm:$0xff]
    %v127 = vld [vmem:[#allocation7 + $0x38] sm:$0xff]
    %v128 = vld [vmem:[#allocation7 + $0x40] sm:$0xff]
    %v129 = vld [vmem:[#allocation7 + $0x48] sm:$0xff]
    %v130 = vld [vmem:[#allocation7 + $0x50] sm:$0xff]
    %v131 = vld [vmem:[#allocation7 + $0x58] sm:$0xff]
    %v132 = vld [vmem:[#allocation7 + $0x60] sm:$0xff]
    %v133 = vld [vmem:[#allocation7 + $0x68] sm:$0xff]
    %v134 = vld [vmem:[#allocation7 + $0x70] sm:$0xff]
    %v135 = vld [vmem:[#allocation7 + $0x78] sm:$0xff]
    %v136 = vld [vmem:[#allocation7 + $0x80] sm:$0xff]
    %v137 = vld [vmem:[#allocation7 + $0x88] sm:$0xff]
    %v138 = vld [vmem:[#allocation7 + $0x90] sm:$0xff]
    %v139 = vld [vmem:[#allocation7 + $0x98] sm:$0xff]
    %v140 = vld [vmem:[#allocation7 + $0xa0] sm:$0xff]
    %v141 = vld [vmem:[#allocation7 + $0xa8] sm:$0xff]
    %v142 = vld [vmem:[#allocation7 + $0xb0] sm:$0xff]
    %v143 = vld [vmem:[#allocation7 + $0xb8] sm:$0xff]
    %v144 = vld [vmem:[#allocation7 + $0xc0] sm:$0xff]
    %v145 = vld [vmem:[#allocation7 + $0xc8] sm:$0xff]
    %v146 = vld [vmem:[#allocation7 + $0xd0] sm:$0xff]
    %v147 = vld [vmem:[#allocation7 + $0xd8] sm:$0xff]
    %v148 = vld [vmem:[#allocation7 + $0xe0] sm:$0xff]
    %v149 = vld [vmem:[#allocation7 + $0xe8] sm:$0xff]
    %v150 = vld [vmem:[#allocation7 + $0xf0] sm:$0xff]
    %v151 = vld [vmem:[#allocation7 + $0xf8] sm:$0xff]
    %v152 = vld [vmem:[#allocation7 + $0x100] sm:$0xff]
    %v153 = vld [vmem:[#allocation7 + $0x108] sm:$0xff]
    %v154 = vld [vmem:[#allocation7 + $0x110] sm:$0xff]
    %v155 = vld [vmem:[#allocation7 + $0x118] sm:$0xff]
    %v156 = vld [vmem:[#allocation7 + $0x120] sm:$0xff]
    %v157 = vld [vmem:[#allocation7 + $0x128] sm:$0xff]
    %v158 = vld [vmem:[#allocation7 + $0x130] sm:$0xff]
    %v159 = vld [vmem:[#allocation7 + $0x138] sm:$0xff]
    %v160 = vld [vmem:[#allocation7 + $0x140] sm:$0xff]
    %v161 = vld [vmem:[#allocation7 + $0x148] sm:$0xff]
    %v162 = vld [vmem:[#allocation7 + $0x150] sm:$0xff]
    %v163 = vld [vmem:[#allocation7 + $0x158] sm:$0xff]
    %v164 = vld [vmem:[#allocation7 + $0x160] sm:$0xff]
    %v165 = vld [vmem:[#allocation7 + $0x168] sm:$0xff]
    %v166 = vld [vmem:[#allocation7 + $0x170] sm:$0xff]
    %v167 = vld [vmem:[#allocation7 + $0x178] sm:$0xff]
    %v168 = vld [vmem:[#allocation7 + $0x180] sm:$0xff]
    %v169 = vld [vmem:[#allocation7 + $0x188] sm:$0xff]
    %v170 = vld [vmem:[#allocation7 + $0x190] sm:$0xff]
    %v171 = vld [vmem:[#allocation7 + $0x198] sm:$0xff]
    %v172 = vld [vmem:[#allocation7 + $0x1a0] sm:$0xff]
    %v173 = vld [vmem:[#allocation7 + $0x1a8] sm:$0xff]
    %v174 = vld [vmem:[#allocation7 + $0x1b0] sm:$0xff]
    %v175 = vld [vmem:[#allocation7 + $0x1b8] sm:$0xff]
    %v176 = vld [vmem:[#allocation7 + $0x1c0] sm:$0xff]
    %v177 = vld [vmem:[#allocation7 + $0x1c8] sm:$0xff]
    %v178 = vld [vmem:[#allocation7 + $0x1d0] sm:$0xff]
    %v179 = vld [vmem:[#allocation7 + $0x1d8] sm:$0xff]
    %v180 = vld [vmem:[#allocation7 + $0x1e0] sm:$0xff]
    %v181 = vld [vmem:[#allocation7 + $0x1e8] sm:$0xff]
    %v182 = vld [vmem:[#allocation7 + $0x1f0] sm:$0xff]
    %v183 = vld [vmem:[#allocation7 + $0x1f8] sm:$0xff]
    %v184 = vld [vmem:[#allocation7 + $0x200] sm:$0xff]
    %v185 = vld [vmem:[#allocation7 + $0x208] sm:$0xff]
    %v186 = vld [vmem:[#allocation7 + $0x210] sm:$0xff]
    %v187 = vld [vmem:[#allocation7 + $0x218] sm:$0xff]
    %v188 = vld [vmem:[#allocation7 + $0x220] sm:$0xff]
    %v189 = vld [vmem:[#allocation7 + $0x228] sm:$0xff]
    %v190 = vld [vmem:[#allocation7 + $0x230] sm:$0xff]
    %v191 = vld [vmem:[#allocation7 + $0x238] sm:$0xff]
    %v192 = vld [vmem:[#allocation7 + $0x240] sm:$0xff]
    %v193 = vld [vmem:[#allocation7 + $0x248] sm:$0xff]
    %v194 = vld [vmem:[#allocation7 + $0x250] sm:$0xff]
    %v195 = vld [vmem:[#allocation7 + $0x258] sm:$0xff]
    %v196 = vld [vmem:[#allocation7 + $0x260] sm:$0xff]
    %v197 = vld [vmem:[#allocation7 + $0x268] sm:$0xff]
    %v198 = vld [vmem:[#allocation7 + $0x270] sm:$0xff]
    %v199 = vld [vmem:[#allocation7 + $0x278] sm:$0xff]
    %v200 = vld [vmem:[#allocation7 + $0x280] sm:$0xff]
    %v201 = vld [vmem:[#allocation7 + $0x288] sm:$0xff]
    %v202 = vld [vmem:[#allocation7 + $0x290] sm:$0xff]
    %v203 = vld [vmem:[#allocation7 + $0x298] sm:$0xff]
    %v204 = vld [vmem:[#allocation7 + $0x2a0] sm:$0xff]
    %v205 = vld [vmem:[#allocation7 + $0x2a8] sm:$0xff]
    %v206 = vld [vmem:[#allocation7 + $0x2b0] sm:$0xff]
    %v207 = vld [vmem:[#allocation7 + $0x2b8] sm:$0xff]
    %v208 = vld [vmem:[#allocation7 + $0x2c0] sm:$0xff]
    %v209 = vld [vmem:[#allocation7 + $0x2c8] sm:$0xff]
    %v210 = vld [vmem:[#allocation7 + $0x2d0] sm:$0xff]
    %v211 = vld [vmem:[#allocation7 + $0x2d8] sm:$0xff]
    %v212 = vld [vmem:[#allocation7 + $0x2e0] sm:$0xff]
    %v213 = vld [vmem:[#allocation7 + $0x2e8] sm:$0xff]
    %v214 = vld [vmem:[#allocation7 + $0x2f0] sm:$0xff]
    %v215 = vld [vmem:[#allocation7 + $0x2f8] sm:$0xff]
    %v217 = vlaneseq
    %v218 = vshrl.u32 %v217, 7
    %v219 = vsub.s32 0, %v218
    %v220 = vrot.slane %v115, %v219
    %v221 = vlaneseq
    %v222 = vshrl.u32 %v221, 7
    %v223 = vsub.s32 1, %v222
    %v224 = vrot.slane %v115, %v223
    %v230 = vunpack.c.l.b16 %v109
    %v231 = vunpack.c.h.b16 %v109
    %v232 = vunpack.c.l.b16 %v110
    %v233 = vunpack.c.h.b16 %v110
    %v234 = vunpack.c.l.b16 %v111
    %v235 = vunpack.c.h.b16 %v111
    %v236 = vpack.c.b16 %v230, %v230
    %v237 = vpack.c.b16 %v231, %v231
    %v238 = vpack.c.b16 %v232, %v232
    %v239 = vpack.c.b16 %v233, %v233
    %v240 = vpack.c.b16 %v234, %v234
    %v241 = vpack.c.b16 %v235, %v235
    %v344 = vunpack.c.l.b16 %v120
    %v345 = vunpack.c.h.b16 %v120
    %v346 = vunpack.c.l.b16 %v121
    %v347 = vunpack.c.h.b16 %v121
    %v348 = vunpack.c.l.b16 %v122
    %v349 = vunpack.c.h.b16 %v122
    %v350 = vunpack.c.l.b16 %v123
    %v351 = vunpack.c.h.b16 %v123
    %v352 = vunpack.c.l.b16 %v124
    %v353 = vunpack.c.h.b16 %v124
    %v354 = vunpack.c.l.b16 %v125
    %v355 = vunpack.c.h.b16 %v125
    %v356 = vunpack.c.l.b16 %v126
    %v357 = vunpack.c.h.b16 %v126
    %v358 = vunpack.c.l.b16 %v127
    %v359 = vunpack.c.h.b16 %v127
    %v360 = vunpack.c.l.b16 %v128
    %v361 = vunpack.c.h.b16 %v128
    %v362 = vunpack.c.l.b16 %v129
    %v363 = vunpack.c.h.b16 %v129
    %v364 = vunpack.c.l.b16 %v130
    %v365 = vunpack.c.h.b16 %v130
    %v366 = vunpack.c.l.b16 %v131
    %v367 = vunpack.c.h.b16 %v131
    %v368 = vunpack.c.l.b16 %v132
    %v369 = vunpack.c.h.b16 %v132
    %v370 = vunpack.c.l.b16 %v133
    %v371 = vunpack.c.h.b16 %v133
    %v372 = vunpack.c.l.b16 %v134
    %v373 = vunpack.c.h.b16 %v134
    %v374 = vunpack.c.l.b16 %v135
    %v375 = vunpack.c.h.b16 %v135
    %v376 = vunpack.c.l.b16 %v136
    %v377 = vunpack.c.h.b16 %v136
    %v378 = vunpack.c.l.b16 %v137
    %v379 = vunpack.c.h.b16 %v137
    %v380 = vunpack.c.l.b16 %v138
    %v381 = vunpack.c.h.b16 %v138
    %v382 = vunpack.c.l.b16 %v139
    %v383 = vunpack.c.h.b16 %v139
    %v384 = vunpack.c.l.b16 %v140
    %v385 = vunpack.c.h.b16 %v140
    %v386 = vunpack.c.l.b16 %v141
    %v387 = vunpack.c.h.b16 %v141
    %v388 = vunpack.c.l.b16 %v142
    %v389 = vunpack.c.h.b16 %v142
    %v390 = vunpack.c.l.b16 %v143
    %v391 = vunpack.c.h.b16 %v143
    %v392 = vunpack.c.l.b16 %v144
    %v393 = vunpack.c.h.b16 %v144
    %v394 = vunpack.c.l.b16 %v145
    %v395 = vunpack.c.h.b16 %v145
    %v396 = vunpack.c.l.b16 %v146
    %v397 = vunpack.c.h.b16 %v146
    %v398 = vunpack.c.l.b16 %v147
    %v399 = vunpack.c.h.b16 %v147
    %v400 = vunpack.c.l.b16 %v148
    %v401 = vunpack.c.h.b16 %v148
    %v402 = vunpack.c.l.b16 %v149
    %v403 = vunpack.c.h.b16 %v149
    %v404 = vunpack.c.l.b16 %v150
    %v405 = vunpack.c.h.b16 %v150
    %v406 = vunpack.c.l.b16 %v151
    %v407 = vunpack.c.h.b16 %v151
    %v408 = vunpack.c.l.b16 %v152
    %v409 = vunpack.c.h.b16 %v152
    %v410 = vunpack.c.l.b16 %v153
    %v411 = vunpack.c.h.b16 %v153
    %v412 = vunpack.c.l.b16 %v154
    %v413 = vunpack.c.h.b16 %v154
    %v414 = vunpack.c.l.b16 %v155
    %v415 = vunpack.c.h.b16 %v155
    %v416 = vunpack.c.l.b16 %v156
    %v417 = vunpack.c.h.b16 %v156
    %v418 = vunpack.c.l.b16 %v157
    %v419 = vunpack.c.h.b16 %v157
    %v420 = vunpack.c.l.b16 %v158
    %v421 = vunpack.c.h.b16 %v158
    %v422 = vunpack.c.l.b16 %v159
    %v423 = vunpack.c.h.b16 %v159
    %v424 = vunpack.c.l.b16 %v160
    %v425 = vunpack.c.h.b16 %v160
    %v426 = vunpack.c.l.b16 %v161
    %v427 = vunpack.c.h.b16 %v161
    %v428 = vunpack.c.l.b16 %v162
    %v429 = vunpack.c.h.b16 %v162
    %v430 = vunpack.c.l.b16 %v163
    %v431 = vunpack.c.h.b16 %v163
    %v432 = vunpack.c.l.b16 %v164
    %v433 = vunpack.c.h.b16 %v164
    %v434 = vunpack.c.l.b16 %v165
    %v435 = vunpack.c.h.b16 %v165
    %v436 = vunpack.c.l.b16 %v166
    %v437 = vunpack.c.h.b16 %v166
    %v438 = vunpack.c.l.b16 %v167
    %v439 = vunpack.c.h.b16 %v167
    %v440 = vunpack.c.l.b16 %v168
    %v441 = vunpack.c.h.b16 %v168
    %v442 = vunpack.c.l.b16 %v169
    %v443 = vunpack.c.h.b16 %v169
    %v444 = vunpack.c.l.b16 %v170
    %v445 = vunpack.c.h.b16 %v170
    %v446 = vunpack.c.l.b16 %v171
    %v447 = vunpack.c.h.b16 %v171
    %v448 = vunpack.c.l.b16 %v172
    %v449 = vunpack.c.h.b16 %v172
    %v450 = vunpack.c.l.b16 %v173
    %v451 = vunpack.c.h.b16 %v173
    %v452 = vunpack.c.l.b16 %v174
    %v453 = vunpack.c.h.b16 %v174
    %v454 = vunpack.c.l.b16 %v175
    %v455 = vunpack.c.h.b16 %v175
    %v456 = vunpack.c.l.b16 %v176
    %v457 = vunpack.c.h.b16 %v176
    %v458 = vunpack.c.l.b16 %v177
    %v459 = vunpack.c.h.b16 %v177
    %v460 = vunpack.c.l.b16 %v178
    %v461 = vunpack.c.h.b16 %v178
    %v462 = vunpack.c.l.b16 %v179
    %v463 = vunpack.c.h.b16 %v179
    %v464 = vunpack.c.l.b16 %v180
    %v465 = vunpack.c.h.b16 %v180
    %v466 = vunpack.c.l.b16 %v181
    %v467 = vunpack.c.h.b16 %v181
    %v468 = vunpack.c.l.b16 %v182
    %v469 = vunpack.c.h.b16 %v182
    %v470 = vunpack.c.l.b16 %v183
    %v471 = vunpack.c.h.b16 %v183
    %v472 = vunpack.c.l.b16 %v184
    %v473 = vunpack.c.h.b16 %v184
    %v474 = vunpack.c.l.b16 %v185
    %v475 = vunpack.c.h.b16 %v185
    %v476 = vunpack.c.l.b16 %v186
    %v477 = vunpack.c.h.b16 %v186
    %v478 = vunpack.c.l.b16 %v187
    %v479 = vunpack.c.h.b16 %v187
    %v480 = vunpack.c.l.b16 %v188
    %v481 = vunpack.c.h.b16 %v188
    %v482 = vunpack.c.l.b16 %v189
    %v483 = vunpack.c.h.b16 %v189
    %v484 = vunpack.c.l.b16 %v190
    %v485 = vunpack.c.h.b16 %v190
    %v486 = vunpack.c.l.b16 %v191
    %v487 = vunpack.c.h.b16 %v191
    %v488 = vunpack.c.l.b16 %v192
    %v489 = vunpack.c.h.b16 %v192
    %v490 = vunpack.c.l.b16 %v193
    %v491 = vunpack.c.h.b16 %v193
    %v492 = vunpack.c.l.b16 %v194
    %v493 = vunpack.c.h.b16 %v194
    %v494 = vunpack.c.l.b16 %v195
    %v495 = vunpack.c.h.b16 %v195
    %v496 = vunpack.c.l.b16 %v196
    %v497 = vunpack.c.h.b16 %v196
    %v498 = vunpack.c.l.b16 %v197
    %v499 = vunpack.c.h.b16 %v197
    %v500 = vunpack.c.l.b16 %v198
    %v501 = vunpack.c.h.b16 %v198
    %v502 = vunpack.c.l.b16 %v199
    %v503 = vunpack.c.h.b16 %v199
    %v504 = vunpack.c.l.b16 %v200
    %v505 = vunpack.c.h.b16 %v200
    %v506 = vunpack.c.l.b16 %v201
    %v507 = vunpack.c.h.b16 %v201
    %v508 = vunpack.c.l.b16 %v202
    %v509 = vunpack.c.h.b16 %v202
    %v510 = vunpack.c.l.b16 %v203
    %v511 = vunpack.c.h.b16 %v203
    %v512 = vunpack.c.l.b16 %v204
    %v513 = vunpack.c.h.b16 %v204
    %v514 = vunpack.c.l.b16 %v205
    %v515 = vunpack.c.h.b16 %v205
    %v516 = vunpack.c.l.b16 %v206
    %v517 = vunpack.c.h.b16 %v206
    %v518 = vunpack.c.l.b16 %v207
    %v519 = vunpack.c.h.b16 %v207
    %v520 = vunpack.c.l.b16 %v208
    %v521 = vunpack.c.h.b16 %v208
    %v522 = vunpack.c.l.b16 %v209
    %v523 = vunpack.c.h.b16 %v209
    %v524 = vunpack.c.l.b16 %v210
    %v525 = vunpack.c.h.b16 %v210
    %v526 = vunpack.c.l.b16 %v211
    %v527 = vunpack.c.h.b16 %v211
    %v528 = vunpack.c.l.b16 %v212
    %v529 = vunpack.c.h.b16 %v212
    %v530 = vunpack.c.l.b16 %v213
    %v531 = vunpack.c.h.b16 %v213
    %v532 = vunpack.c.l.b16 %v214
    %v533 = vunpack.c.h.b16 %v214
    %v534 = vunpack.c.l.b16 %v215
    %v535 = vunpack.c.h.b16 %v215
    %v536 = vpack.c.b16 %v346, %v344
    %v537 = vpack.c.b16 %v347, %v345
    %v538 = vpack.c.b16 %v350, %v348
    %v539 = vpack.c.b16 %v351, %v349
    %v540 = vpack.c.b16 %v354, %v352
    %v541 = vpack.c.b16 %v355, %v353
    %v542 = vpack.c.b16 %v358, %v356
    %v543 = vpack.c.b16 %v359, %v357
    %v544 = vpack.c.b16 %v362, %v360
    %v545 = vpack.c.b16 %v363, %v361
    %v546 = vpack.c.b16 %v366, %v364
    %v547 = vpack.c.b16 %v367, %v365
    %v548 = vpack.c.b16 %v370, %v368
    %v549 = vpack.c.b16 %v371, %v369
    %v550 = vpack.c.b16 %v374, %v372
    %v551 = vpack.c.b16 %v375, %v373
    %v552 = vpack.c.b16 %v378, %v376
    %v553 = vpack.c.b16 %v379, %v377
    %v554 = vpack.c.b16 %v382, %v380
    %v555 = vpack.c.b16 %v383, %v381
    %v556 = vpack.c.b16 %v386, %v384
    %v557 = vpack.c.b16 %v387, %v385
    %v558 = vpack.c.b16 %v390, %v388
    %v559 = vpack.c.b16 %v391, %v389
    %v560 = vpack.c.b16 %v394, %v392
    %v561 = vpack.c.b16 %v395, %v393
    %v562 = vpack.c.b16 %v398, %v396
    %v563 = vpack.c.b16 %v399, %v397
    %v564 = vpack.c.b16 %v402, %v400
    %v565 = vpack.c.b16 %v403, %v401
    %v566 = vpack.c.b16 %v406, %v404
    %v567 = vpack.c.b16 %v407, %v405
    %v568 = vpack.c.b16 %v410, %v408
    %v569 = vpack.c.b16 %v411, %v409
    %v570 = vpack.c.b16 %v414, %v412
    %v571 = vpack.c.b16 %v415, %v413
    %v572 = vpack.c.b16 %v418, %v416
    %v573 = vpack.c.b16 %v419, %v417
    %v574 = vpack.c.b16 %v422, %v420
    %v575 = vpack.c.b16 %v423, %v421
    %v576 = vpack.c.b16 %v426, %v424
    %v577 = vpack.c.b16 %v427, %v425
    %v578 = vpack.c.b16 %v430, %v428
    %v579 = vpack.c.b16 %v431, %v429
    %v580 = vpack.c.b16 %v434, %v432
    %v581 = vpack.c.b16 %v435, %v433
    %v582 = vpack.c.b16 %v438, %v436
    %v583 = vpack.c.b16 %v439, %v437
    %v584 = vpack.c.b16 %v442, %v440
    %v585 = vpack.c.b16 %v443, %v441
    %v586 = vpack.c.b16 %v446, %v444
    %v587 = vpack.c.b16 %v447, %v445
    %v588 = vpack.c.b16 %v450, %v448
    %v589 = vpack.c.b16 %v451, %v449
    %v590 = vpack.c.b16 %v454, %v452
    %v591 = vpack.c.b16 %v455, %v453
    %v592 = vpack.c.b16 %v458, %v456
    %v593 = vpack.c.b16 %v459, %v457
    %v594 = vpack.c.b16 %v462, %v460
    %v595 = vpack.c.b16 %v463, %v461
    %v596 = vpack.c.b16 %v466, %v464
    %v597 = vpack.c.b16 %v467, %v465
    %v598 = vpack.c.b16 %v470, %v468
    %v599 = vpack.c.b16 %v471, %v469
    %v600 = vpack.c.b16 %v474, %v472
    %v601 = vpack.c.b16 %v475, %v473
    %v602 = vpack.c.b16 %v478, %v476
    %v603 = vpack.c.b16 %v479, %v477
    %v604 = vpack.c.b16 %v482, %v480
    %v605 = vpack.c.b16 %v483, %v481
    %v606 = vpack.c.b16 %v486, %v484
    %v607 = vpack.c.b16 %v487, %v485
    %v608 = vpack.c.b16 %v490, %v488
    %v609 = vpack.c.b16 %v491, %v489
    %v610 = vpack.c.b16 %v494, %v492
    %v611 = vpack.c.b16 %v495, %v493
    %v612 = vpack.c.b16 %v498, %v496
    %v613 = vpack.c.b16 %v499, %v497
    %v614 = vpack.c.b16 %v502, %v500
    %v615 = vpack.c.b16 %v503, %v501
    %v616 = vpack.c.b16 %v506, %v504
    %v617 = vpack.c.b16 %v507, %v505
    %v618 = vpack.c.b16 %v510, %v508
    %v619 = vpack.c.b16 %v511, %v509
    %v620 = vpack.c.b16 %v514, %v512
    %v621 = vpack.c.b16 %v515, %v513
    %v622 = vpack.c.b16 %v518, %v516
    %v623 = vpack.c.b16 %v519, %v517
    %v624 = vpack.c.b16 %v522, %v520
    %v625 = vpack.c.b16 %v523, %v521
    %v626 = vpack.c.b16 %v526, %v524
    %v627 = vpack.c.b16 %v527, %v525
    %v628 = vpack.c.b16 %v530, %v528
    %v629 = vpack.c.b16 %v531, %v529
    %v630 = vpack.c.b16 %v534, %v532
    %v631 = vpack.c.b16 %v535, %v533
    %728 = vmatprep.subr.bf16.mxu0 %v551
    %729 = vmatpush1.bf16.msra.mxu0 %v550
    %730 = vmatprep.subr.bf16.mxu0 %v549
    %731 = vmatpush1.bf16.msra.mxu0 %v548
    %732 = vmatprep.subr.bf16.mxu0 %v547
    %733 = vmatpush1.bf16.msra.mxu0 %v546
    %734 = vmatprep.subr.bf16.mxu0 %v545
    %735 = vmatpush1.bf16.msra.mxu0 %v544
    %736 = vmatprep.subr.bf16.mxu0 %v543
    %737 = vmatpush1.bf16.msra.mxu0 %v542
    %738 = vmatprep.subr.bf16.mxu0 %v541
    %739 = vmatpush1.bf16.msra.mxu0 %v540
    %740 = vmatprep.subr.bf16.mxu0 %v539
    %741 = vmatpush1.bf16.msra.mxu0 %v538
    %742 = vmatprep.subr.bf16.mxu0 %v537
    %743 = vmatpush1.bf16.msra.mxu0 %v536
    %744 = vmatprep.subr.bf16.mxu0 %v567
    %745 = vmatpush2.bf16.msra.mxu0 %v566
    %746 = vmatprep.subr.bf16.mxu0 %v565
    %747 = vmatpush2.bf16.msra.mxu0 %v564
    %748 = vmatprep.subr.bf16.mxu0 %v563
    %749 = vmatpush2.bf16.msra.mxu0 %v562
    %750 = vmatprep.subr.bf16.mxu0 %v561
    %751 = vmatpush2.bf16.msra.mxu0 %v560
    %752 = vmatprep.subr.bf16.mxu0 %v559
    %753 = vmatpush2.bf16.msra.mxu0 %v558
    %754 = vmatprep.subr.bf16.mxu0 %v557
    %755 = vmatpush2.bf16.msra.mxu0 %v556
    %756 = vmatprep.subr.bf16.mxu0 %v555
    %757 = vmatpush2.bf16.msra.mxu0 %v554
    %758 = vmatprep.subr.bf16.mxu0 %v553
    %759 = vmatpush2.bf16.msra.mxu0 %v552
    %760 = vmatprep.mubr.bf16.mxu0 %v237
    %761 = vmatmul.mubr.bf16.gmra.mxu0 %v236
    %v762 = vpop.f32.mrf.mxu0
    %v763 = vadd.f32 %v220, %v762
    %v764 = vpop.f32.mrf.mxu0
    %v765 = vadd.f32 %v224, %v764
    %v766 = vpop.f32.mrf.mxu0
    %v767 = vpop.f32.mrf.mxu0
    %768 = vdwg.mxu0
    %769 = vmatprep.subr.bf16.mxu0 %v583
    %770 = vmatpush1.bf16.msra.mxu0 %v582
    %771 = vmatprep.subr.bf16.mxu0 %v581
    %772 = vmatpush1.bf16.msra.mxu0 %v580
    %773 = vmatprep.subr.bf16.mxu0 %v579
    %774 = vmatpush1.bf16.msra.mxu0 %v578
    %775 = vmatprep.subr.bf16.mxu0 %v577
    %776 = vmatpush1.bf16.msra.mxu0 %v576
    %777 = vmatprep.subr.bf16.mxu0 %v575
    %778 = vmatpush1.bf16.msra.mxu0 %v574
    %779 = vmatprep.subr.bf16.mxu0 %v573
    %780 = vmatpush1.bf16.msra.mxu0 %v572
    %781 = vmatprep.subr.bf16.mxu0 %v571
    %782 = vmatpush1.bf16.msra.mxu0 %v570
    %783 = vmatprep.subr.bf16.mxu0 %v569
    %784 = vmatpush1.bf16.msra.mxu0 %v568
    %785 = vmatprep.subr.bf16.mxu0 %v599
    %786 = vmatpush2.bf16.msra.mxu0 %v598
    %787 = vmatprep.subr.bf16.mxu0 %v597
    %788 = vmatpush2.bf16.msra.mxu0 %v596
    %789 = vmatprep.subr.bf16.mxu0 %v595
    %790 = vmatpush2.bf16.msra.mxu0 %v594
    %791 = vmatprep.subr.bf16.mxu0 %v593
    %792 = vmatpush2.bf16.msra.mxu0 %v592
    %793 = vmatprep.subr.bf16.mxu0 %v591
    %794 = vmatpush2.bf16.msra.mxu0 %v590
    %795 = vmatprep.subr.bf16.mxu0 %v589
    %796 = vmatpush2.bf16.msra.mxu0 %v588
    %797 = vmatprep.subr.bf16.mxu0 %v587
    %798 = vmatpush2.bf16.msra.mxu0 %v586
    %799 = vmatprep.subr.bf16.mxu0 %v585
    %800 = vmatpush2.bf16.msra.mxu0 %v584
    %801 = vmatprep.mubr.bf16.mxu0 %v239
    %802 = vmatmul.mubr.bf16.gmra.mxu0 %v238
    %v803 = vpop.f32.mrf.mxu0
    %v804 = vadd.f32 %v763, %v803
    %v805 = vpop.f32.mrf.mxu0
    %v806 = vadd.f32 %v765, %v805
    %v807 = vpop.f32.mrf.mxu0
    %v808 = vpop.f32.mrf.mxu0
    %809 = vdwg.mxu0
    %810 = vmatprep.subr.bf16.mxu0 %v615
    %811 = vmatpush1.bf16.msra.mxu0 %v614
    %812 = vmatprep.subr.bf16.mxu0 %v613
    %813 = vmatpush1.bf16.msra.mxu0 %v612
    %814 = vmatprep.subr.bf16.mxu0 %v611
    %815 = vmatpush1.bf16.msra.mxu0 %v610
    %816 = vmatprep.subr.bf16.mxu0 %v609
    %817 = vmatpush1.bf16.msra.mxu0 %v608
    %818 = vmatprep.subr.bf16.mxu0 %v607
    %819 = vmatpush1.bf16.msra.mxu0 %v606
    %820 = vmatprep.subr.bf16.mxu0 %v605
    %821 = vmatpush1.bf16.msra.mxu0 %v604
    %822 = vmatprep.subr.bf16.mxu0 %v603
    %823 = vmatpush1.bf16.msra.mxu0 %v602
    %824 = vmatprep.subr.bf16.mxu0 %v601
    %825 = vmatpush1.bf16.msra.mxu0 %v600
    %826 = vmatprep.subr.bf16.mxu0 %v631
    %827 = vmatpush2.bf16.msra.mxu0 %v630
    %828 = vmatprep.subr.bf16.mxu0 %v629
    %829 = vmatpush2.bf16.msra.mxu0 %v628
    %830 = vmatprep.subr.bf16.mxu0 %v627
    %831 = vmatpush2.bf16.msra.mxu0 %v626
    %832 = vmatprep.subr.bf16.mxu0 %v625
    %833 = vmatpush2.bf16.msra.mxu0 %v624
    %834 = vmatprep.subr.bf16.mxu0 %v623
    %835 = vmatpush2.bf16.msra.mxu0 %v622
    %836 = vmatprep.subr.bf16.mxu0 %v621
    %837 = vmatpush2.bf16.msra.mxu0 %v620
    %838 = vmatprep.subr.bf16.mxu0 %v619
    %839 = vmatpush2.bf16.msra.mxu0 %v618
    %840 = vmatprep.subr.bf16.mxu0 %v617
    %841 = vmatpush2.bf16.msra.mxu0 %v616
    %842 = vmatprep.mubr.bf16.mxu0 %v241
    %843 = vmatmul.mubr.bf16.gmra.mxu0 %v240
    %v844 = vpop.f32.mrf.mxu0
    %v845 = vadd.f32 %v804, %v844
    %v846 = vpop.f32.mrf.mxu0
    %v847 = vadd.f32 %v806, %v846
    %v848 = vpop.f32.mrf.mxu0
    %v849 = vpop.f32.mrf.mxu0
    %850 = vdwg.mxu0
    %v851 = vmax.f32 %v845, 0.0
    %v852 = vmax.f32 %v847, 0.0
    %v853 = vpack.c.bf16 %v851, %v851
    %v854 = vpack.c.bf16 %v852, %v852
    %v855 = vld [vmem:[#allocation8] sm:$0xff]
    %v856 = vld [vmem:[#allocation8 + $0x8] sm:$0xff]
    %v857 = vld [vmem:[#allocation8 + $0x10] sm:$0xff]
    %v858 = vld [vmem:[#allocation8 + $0x18] sm:$0xff]
    %v859 = vld [vmem:[#allocation8 + $0x20] sm:$0xff]
    %v860 = vld [vmem:[#allocation8 + $0x28] sm:$0xff]
    %v861 = vld [vmem:[#allocation8 + $0x30] sm:$0xff]
    %v862 = vld [vmem:[#allocation8 + $0x38] sm:$0xff]
    %v863 = vld [vmem:[#allocation8 + $0x40] sm:$0xff]
    %v864 = vld [vmem:[#allocation8 + $0x48] sm:$0xff]
    %v865 = vld [vmem:[#allocation8 + $0x50] sm:$0xff]
    %v866 = vld [vmem:[#allocation8 + $0x58] sm:$0xff]
    %v867 = vld [vmem:[#allocation8 + $0x60] sm:$0xff]
    %v868 = vld [vmem:[#allocation8 + $0x68] sm:$0xff]
    %v869 = vld [vmem:[#allocation8 + $0x70] sm:$0xff]
    %v870 = vld [vmem:[#allocation8 + $0x78] sm:$0xff]
    %v871 = vld [vmem:[#allocation8 + $0x80] sm:$0xff]
    %v872 = vld [vmem:[#allocation8 + $0x88] sm:$0xff]
    %v873 = vld [vmem:[#allocation8 + $0x90] sm:$0xff]
    %v874 = vld [vmem:[#allocation8 + $0x98] sm:$0xff]
    %v875 = vld [vmem:[#allocation8 + $0xa0] sm:$0xff]
    %v876 = vld [vmem:[#allocation8 + $0xa8] sm:$0xff]
    %v877 = vld [vmem:[#allocation8 + $0xb0] sm:$0xff]
    %v878 = vld [vmem:[#allocation8 + $0xb8] sm:$0xff]
    %v879 = vld [vmem:[#allocation8 + $0xc0] sm:$0xff]
    %v880 = vld [vmem:[#allocation8 + $0xc8] sm:$0xff]
    %v881 = vld [vmem:[#allocation8 + $0xd0] sm:$0xff]
    %v882 = vld [vmem:[#allocation8 + $0xd8] sm:$0xff]
    %v883 = vld [vmem:[#allocation8 + $0xe0] sm:$0xff]
    %v884 = vld [vmem:[#allocation8 + $0xe8] sm:$0xff]
    %v885 = vld [vmem:[#allocation8 + $0xf0] sm:$0xff]
    %v886 = vld [vmem:[#allocation8 + $0xf8] sm:$0xff]
    %v887 = vld [vmem:[#allocation8 + $0x100] sm:$0xff]
    %v888 = vld [vmem:[#allocation8 + $0x108] sm:$0xff]
    %v889 = vld [vmem:[#allocation8 + $0x110] sm:$0xff]
    %v890 = vld [vmem:[#allocation8 + $0x118] sm:$0xff]
    %v891 = vld [vmem:[#allocation8 + $0x120] sm:$0xff]
    %v892 = vld [vmem:[#allocation8 + $0x128] sm:$0xff]
    %v893 = vld [vmem:[#allocation8 + $0x130] sm:$0xff]
    %v894 = vld [vmem:[#allocation8 + $0x138] sm:$0xff]
    %v895 = vld [vmem:[#allocation8 + $0x140] sm:$0xff]
    %v896 = vld [vmem:[#allocation8 + $0x148] sm:$0xff]
    %v897 = vld [vmem:[#allocation8 + $0x150] sm:$0xff]
    %v898 = vld [vmem:[#allocation8 + $0x158] sm:$0xff]
    %v899 = vld [vmem:[#allocation8 + $0x160] sm:$0xff]
    %v900 = vld [vmem:[#allocation8 + $0x168] sm:$0xff]
    %v901 = vld [vmem:[#allocation8 + $0x170] sm:$0xff]
    %v902 = vld [vmem:[#allocation8 + $0x178] sm:$0xff]
    %v903 = vld [vmem:[#allocation8 + $0x180] sm:$0xff]
    %v904 = vld [vmem:[#allocation8 + $0x188] sm:$0xff]
    %v905 = vld [vmem:[#allocation8 + $0x190] sm:$0xff]
    %v906 = vld [vmem:[#allocation8 + $0x198] sm:$0xff]
    %v907 = vld [vmem:[#allocation8 + $0x1a0] sm:$0xff]
    %v908 = vld [vmem:[#allocation8 + $0x1a8] sm:$0xff]
    %v909 = vld [vmem:[#allocation8 + $0x1b0] sm:$0xff]
    %v910 = vld [vmem:[#allocation8 + $0x1b8] sm:$0xff]
    %v911 = vld [vmem:[#allocation8 + $0x1c0] sm:$0xff]
    %v912 = vld [vmem:[#allocation8 + $0x1c8] sm:$0xff]
    %v913 = vld [vmem:[#allocation8 + $0x1d0] sm:$0xff]
    %v914 = vld [vmem:[#allocation8 + $0x1d8] sm:$0xff]
    %v915 = vld [vmem:[#allocation8 + $0x1e0] sm:$0xff]
    %v916 = vld [vmem:[#allocation8 + $0x1e8] sm:$0xff]
    %v917 = vld [vmem:[#allocation8 + $0x1f0] sm:$0xff]
    %v918 = vld [vmem:[#allocation8 + $0x1f8] sm:$0xff]
    %v919 = vld [vmem:[#allocation8 + $0x200] sm:$0xff]
    %v920 = vld [vmem:[#allocation8 + $0x208] sm:$0xff]
    %v921 = vld [vmem:[#allocation8 + $0x210] sm:$0xff]
    %v922 = vld [vmem:[#allocation8 + $0x218] sm:$0xff]
    %v923 = vld [vmem:[#allocation8 + $0x220] sm:$0xff]
    %v924 = vld [vmem:[#allocation8 + $0x228] sm:$0xff]
    %v925 = vld [vmem:[#allocation8 + $0x230] sm:$0xff]
    %v926 = vld [vmem:[#allocation8 + $0x238] sm:$0xff]
    %v927 = vld [vmem:[#allocation8 + $0x240] sm:$0xff]
    %v928 = vld [vmem:[#allocation8 + $0x248] sm:$0xff]
    %v929 = vld [vmem:[#allocation8 + $0x250] sm:$0xff]
    %v930 = vld [vmem:[#allocation8 + $0x258] sm:$0xff]
    %v931 = vld [vmem:[#allocation8 + $0x260] sm:$0xff]
    %v932 = vld [vmem:[#allocation8 + $0x268] sm:$0xff]
    %v933 = vld [vmem:[#allocation8 + $0x270] sm:$0xff]
    %v934 = vld [vmem:[#allocation8 + $0x278] sm:$0xff]
    %v935 = vld [vmem:[#allocation8 + $0x280] sm:$0xff]
    %v936 = vld [vmem:[#allocation8 + $0x288] sm:$0xff]
    %v937 = vld [vmem:[#allocation8 + $0x290] sm:$0xff]
    %v938 = vld [vmem:[#allocation8 + $0x298] sm:$0xff]
    %v939 = vld [vmem:[#allocation8 + $0x2a0] sm:$0xff]
    %v940 = vld [vmem:[#allocation8 + $0x2a8] sm:$0xff]
    %v941 = vld [vmem:[#allocation8 + $0x2b0] sm:$0xff]
    %v942 = vld [vmem:[#allocation8 + $0x2b8] sm:$0xff]
    %v943 = vld [vmem:[#allocation8 + $0x2c0] sm:$0xff]
    %v944 = vld [vmem:[#allocation8 + $0x2c8] sm:$0xff]
    %v945 = vld [vmem:[#allocation8 + $0x2d0] sm:$0xff]
    %v946 = vld [vmem:[#allocation8 + $0x2d8] sm:$0xff]
    %v947 = vld [vmem:[#allocation8 + $0x2e0] sm:$0xff]
    %v948 = vld [vmem:[#allocation8 + $0x2e8] sm:$0xff]
    %v949 = vld [vmem:[#allocation8 + $0x2f0] sm:$0xff]
    %v950 = vld [vmem:[#allocation8 + $0x2f8] sm:$0xff]
    %v952 = vlaneseq
    %v953 = vshrl.u32 %v952, 7
    %v954 = vsub.s32 0, %v953
    %v955 = vrot.slane %v116, %v954
    %v956 = vlaneseq
    %v957 = vshrl.u32 %v956, 7
    %v958 = vsub.s32 1, %v957
    %v959 = vrot.slane %v116, %v958
    %v965 = vunpack.c.l.b16 %v112
    %v966 = vunpack.c.h.b16 %v112
    %v967 = vunpack.c.l.b16 %v113
    %v968 = vunpack.c.h.b16 %v113
    %v969 = vunpack.c.l.b16 %v114
    %v970 = vunpack.c.h.b16 %v114
    %v971 = vpack.c.b16 %v965, %v965
    %v972 = vpack.c.b16 %v966, %v966
    %v973 = vpack.c.b16 %v967, %v967
    %v974 = vpack.c.b16 %v968, %v968
    %v975 = vpack.c.b16 %v969, %v969
    %v976 = vpack.c.b16 %v970, %v970
    %v1079 = vunpack.c.l.b16 %v855
    %v1080 = vunpack.c.h.b16 %v855
    %v1081 = vunpack.c.l.b16 %v856
    %v1082 = vunpack.c.h.b16 %v856
    %v1083 = vunpack.c.l.b16 %v857
    %v1084 = vunpack.c.h.b16 %v857
    %v1085 = vunpack.c.l.b16 %v858
    %v1086 = vunpack.c.h.b16 %v858
    %v1087 = vunpack.c.l.b16 %v859
    %v1088 = vunpack.c.h.b16 %v859
    %v1089 = vunpack.c.l.b16 %v860
    %v1090 = vunpack.c.h.b16 %v860
    %v1091 = vunpack.c.l.b16 %v861
    %v1092 = vunpack.c.h.b16 %v861
    %v1093 = vunpack.c.l.b16 %v862
    %v1094 = vunpack.c.h.b16 %v862
    %v1095 = vunpack.c.l.b16 %v863
    %v1096 = vunpack.c.h.b16 %v863
    %v1097 = vunpack.c.l.b16 %v864
    %v1098 = vunpack.c.h.b16 %v864
    %v1099 = vunpack.c.l.b16 %v865
    %v1100 = vunpack.c.h.b16 %v865
    %v1101 = vunpack.c.l.b16 %v866
    %v1102 = vunpack.c.h.b16 %v866
    %v1103 = vunpack.c.l.b16 %v867
    %v1104 = vunpack.c.h.b16 %v867
    %v1105 = vunpack.c.l.b16 %v868
    %v1106 = vunpack.c.h.b16 %v868
    %v1107 = vunpack.c.l.b16 %v869
    %v1108 = vunpack.c.h.b16 %v869
    %v1109 = vunpack.c.l.b16 %v870
    %v1110 = vunpack.c.h.b16 %v870
    %v1111 = vunpack.c.l.b16 %v871
    %v1112 = vunpack.c.h.b16 %v871
    %v1113 = vunpack.c.l.b16 %v872
    %v1114 = vunpack.c.h.b16 %v872
    %v1115 = vunpack.c.l.b16 %v873
    %v1116 = vunpack.c.h.b16 %v873
    %v1117 = vunpack.c.l.b16 %v874
    %v1118 = vunpack.c.h.b16 %v874
    %v1119 = vunpack.c.l.b16 %v875
    %v1120 = vunpack.c.h.b16 %v875
    %v1121 = vunpack.c.l.b16 %v876
    %v1122 = vunpack.c.h.b16 %v876
    %v1123 = vunpack.c.l.b16 %v877
    %v1124 = vunpack.c.h.b16 %v877
    %v1125 = vunpack.c.l.b16 %v878
    %v1126 = vunpack.c.h.b16 %v878
    %v1127 = vunpack.c.l.b16 %v879
    %v1128 = vunpack.c.h.b16 %v879
    %v1129 = vunpack.c.l.b16 %v880
    %v1130 = vunpack.c.h.b16 %v880
    %v1131 = vunpack.c.l.b16 %v881
    %v1132 = vunpack.c.h.b16 %v881
    %v1133 = vunpack.c.l.b16 %v882
    %v1134 = vunpack.c.h.b16 %v882
    %v1135 = vunpack.c.l.b16 %v883
    %v1136 = vunpack.c.h.b16 %v883
    %v1137 = vunpack.c.l.b16 %v884
    %v1138 = vunpack.c.h.b16 %v884
    %v1139 = vunpack.c.l.b16 %v885
    %v1140 = vunpack.c.h.b16 %v885
    %v1141 = vunpack.c.l.b16 %v886
    %v1142 = vunpack.c.h.b16 %v886
    %v1143 = vunpack.c.l.b16 %v887
    %v1144 = vunpack.c.h.b16 %v887
    %v1145 = vunpack.c.l.b16 %v888
    %v1146 = vunpack.c.h.b16 %v888
    %v1147 = vunpack.c.l.b16 %v889
    %v1148 = vunpack.c.h.b16 %v889
    %v1149 = vunpack.c.l.b16 %v890
    %v1150 = vunpack.c.h.b16 %v890
    %v1151 = vunpack.c.l.b16 %v891
    %v1152 = vunpack.c.h.b16 %v891
    %v1153 = vunpack.c.l.b16 %v892
    %v1154 = vunpack.c.h.b16 %v892
    %v1155 = vunpack.c.l.b16 %v893
    %v1156 = vunpack.c.h.b16 %v893
    %v1157 = vunpack.c.l.b16 %v894
    %v1158 = vunpack.c.h.b16 %v894
    %v1159 = vunpack.c.l.b16 %v895
    %v1160 = vunpack.c.h.b16 %v895
    %v1161 = vunpack.c.l.b16 %v896
    %v1162 = vunpack.c.h.b16 %v896
    %v1163 = vunpack.c.l.b16 %v897
    %v1164 = vunpack.c.h.b16 %v897
    %v1165 = vunpack.c.l.b16 %v898
    %v1166 = vunpack.c.h.b16 %v898
    %v1167 = vunpack.c.l.b16 %v899
    %v1168 = vunpack.c.h.b16 %v899
    %v1169 = vunpack.c.l.b16 %v900
    %v1170 = vunpack.c.h.b16 %v900
    %v1171 = vunpack.c.l.b16 %v901
    %v1172 = vunpack.c.h.b16 %v901
    %v1173 = vunpack.c.l.b16 %v902
    %v1174 = vunpack.c.h.b16 %v902
    %v1175 = vunpack.c.l.b16 %v903
    %v1176 = vunpack.c.h.b16 %v903
    %v1177 = vunpack.c.l.b16 %v904
    %v1178 = vunpack.c.h.b16 %v904
    %v1179 = vunpack.c.l.b16 %v905
    %v1180 = vunpack.c.h.b16 %v905
    %v1181 = vunpack.c.l.b16 %v906
    %v1182 = vunpack.c.h.b16 %v906
    %v1183 = vunpack.c.l.b16 %v907
    %v1184 = vunpack.c.h.b16 %v907
    %v1185 = vunpack.c.l.b16 %v908
    %v1186 = vunpack.c.h.b16 %v908
    %v1187 = vunpack.c.l.b16 %v909
    %v1188 = vunpack.c.h.b16 %v909
    %v1189 = vunpack.c.l.b16 %v910
    %v1190 = vunpack.c.h.b16 %v910
    %v1191 = vunpack.c.l.b16 %v911
    %v1192 = vunpack.c.h.b16 %v911
    %v1193 = vunpack.c.l.b16 %v912
    %v1194 = vunpack.c.h.b16 %v912
    %v1195 = vunpack.c.l.b16 %v913
    %v1196 = vunpack.c.h.b16 %v913
    %v1197 = vunpack.c.l.b16 %v914
    %v1198 = vunpack.c.h.b16 %v914
    %v1199 = vunpack.c.l.b16 %v915
    %v1200 = vunpack.c.h.b16 %v915
    %v1201 = vunpack.c.l.b16 %v916
    %v1202 = vunpack.c.h.b16 %v916
    %v1203 = vunpack.c.l.b16 %v917
    %v1204 = vunpack.c.h.b16 %v917
    %v1205 = vunpack.c.l.b16 %v918
    %v1206 = vunpack.c.h.b16 %v918
    %v1207 = vunpack.c.l.b16 %v919
    %v1208 = vunpack.c.h.b16 %v919
    %v1209 = vunpack.c.l.b16 %v920
    %v1210 = vunpack.c.h.b16 %v920
    %v1211 = vunpack.c.l.b16 %v921
    %v1212 = vunpack.c.h.b16 %v921
    %v1213 = vunpack.c.l.b16 %v922
    %v1214 = vunpack.c.h.b16 %v922
    %v1215 = vunpack.c.l.b16 %v923
    %v1216 = vunpack.c.h.b16 %v923
    %v1217 = vunpack.c.l.b16 %v924
    %v1218 = vunpack.c.h.b16 %v924
    %v1219 = vunpack.c.l.b16 %v925
    %v1220 = vunpack.c.h.b16 %v925
    %v1221 = vunpack.c.l.b16 %v926
    %v1222 = vunpack.c.h.b16 %v926
    %v1223 = vunpack.c.l.b16 %v927
    %v1224 = vunpack.c.h.b16 %v927
    %v1225 = vunpack.c.l.b16 %v928
    %v1226 = vunpack.c.h.b16 %v928
    %v1227 = vunpack.c.l.b16 %v929
    %v1228 = vunpack.c.h.b16 %v929
    %v1229 = vunpack.c.l.b16 %v930
    %v1230 = vunpack.c.h.b16 %v930
    %v1231 = vunpack.c.l.b16 %v931
    %v1232 = vunpack.c.h.b16 %v931
    %v1233 = vunpack.c.l.b16 %v932
    %v1234 = vunpack.c.h.b16 %v932
    %v1235 = vunpack.c.l.b16 %v933
    %v1236 = vunpack.c.h.b16 %v933
    %v1237 = vunpack.c.l.b16 %v934
    %v1238 = vunpack.c.h.b16 %v934
    %v1239 = vunpack.c.l.b16 %v935
    %v1240 = vunpack.c.h.b16 %v935
    %v1241 = vunpack.c.l.b16 %v936
    %v1242 = vunpack.c.h.b16 %v936
    %v1243 = vunpack.c.l.b16 %v937
    %v1244 = vunpack.c.h.b16 %v937
    %v1245 = vunpack.c.l.b16 %v938
    %v1246 = vunpack.c.h.b16 %v938
    %v1247 = vunpack.c.l.b16 %v939
    %v1248 = vunpack.c.h.b16 %v939
    %v1249 = vunpack.c.l.b16 %v940
    %v1250 = vunpack.c.h.b16 %v940
    %v1251 = vunpack.c.l.b16 %v941
    %v1252 = vunpack.c.h.b16 %v941
    %v1253 = vunpack.c.l.b16 %v942
    %v1254 = vunpack.c.h.b16 %v942
    %v1255 = vunpack.c.l.b16 %v943
    %v1256 = vunpack.c.h.b16 %v943
    %v1257 = vunpack.c.l.b16 %v944
    %v1258 = vunpack.c.h.b16 %v944
    %v1259 = vunpack.c.l.b16 %v945
    %v1260 = vunpack.c.h.b16 %v945
    %v1261 = vunpack.c.l.b16 %v946
    %v1262 = vunpack.c.h.b16 %v946
    %v1263 = vunpack.c.l.b16 %v947
    %v1264 = vunpack.c.h.b16 %v947
    %v1265 = vunpack.c.l.b16 %v948
    %v1266 = vunpack.c.h.b16 %v948
    %v1267 = vunpack.c.l.b16 %v949
    %v1268 = vunpack.c.h.b16 %v949
    %v1269 = vunpack.c.l.b16 %v950
    %v1270 = vunpack.c.h.b16 %v950
    %v1271 = vpack.c.b16 %v1081, %v1079
    %v1272 = vpack.c.b16 %v1082, %v1080
    %v1273 = vpack.c.b16 %v1085, %v1083
    %v1274 = vpack.c.b16 %v1086, %v1084
    %v1275 = vpack.c.b16 %v1089, %v1087
    %v1276 = vpack.c.b16 %v1090, %v1088
    %v1277 = vpack.c.b16 %v1093, %v1091
    %v1278 = vpack.c.b16 %v1094, %v1092
    %v1279 = vpack.c.b16 %v1097, %v1095
    %v1280 = vpack.c.b16 %v1098, %v1096
    %v1281 = vpack.c.b16 %v1101, %v1099
    %v1282 = vpack.c.b16 %v1102, %v1100
    %v1283 = vpack.c.b16 %v1105, %v1103
    %v1284 = vpack.c.b16 %v1106, %v1104
    %v1285 = vpack.c.b16 %v1109, %v1107
    %v1286 = vpack.c.b16 %v1110, %v1108
    %v1287 = vpack.c.b16 %v1113, %v1111
    %v1288 = vpack.c.b16 %v1114, %v1112
    %v1289 = vpack.c.b16 %v1117, %v1115
    %v1290 = vpack.c.b16 %v1118, %v1116
    %v1291 = vpack.c.b16 %v1121, %v1119
    %v1292 = vpack.c.b16 %v1122, %v1120
    %v1293 = vpack.c.b16 %v1125, %v1123
    %v1294 = vpack.c.b16 %v1126, %v1124
    %v1295 = vpack.c.b16 %v1129, %v1127
    %v1296 = vpack.c.b16 %v1130, %v1128
    %v1297 = vpack.c.b16 %v1133, %v1131
    %v1298 = vpack.c.b16 %v1134, %v1132
    %v1299 = vpack.c.b16 %v1137, %v1135
    %v1300 = vpack.c.b16 %v1138, %v1136
    %v1301 = vpack.c.b16 %v1141, %v1139
    %v1302 = vpack.c.b16 %v1142, %v1140
    %v1303 = vpack.c.b16 %v1145, %v1143
    %v1304 = vpack.c.b16 %v1146, %v1144
    %v1305 = vpack.c.b16 %v1149, %v1147
    %v1306 = vpack.c.b16 %v1150, %v1148
    %v1307 = vpack.c.b16 %v1153, %v1151
    %v1308 = vpack.c.b16 %v1154, %v1152
    %v1309 = vpack.c.b16 %v1157, %v1155
    %v1310 = vpack.c.b16 %v1158, %v1156
    %v1311 = vpack.c.b16 %v1161, %v1159
    %v1312 = vpack.c.b16 %v1162, %v1160
    %v1313 = vpack.c.b16 %v1165, %v1163
    %v1314 = vpack.c.b16 %v1166, %v1164
    %v1315 = vpack.c.b16 %v1169, %v1167
    %v1316 = vpack.c.b16 %v1170, %v1168
    %v1317 = vpack.c.b16 %v1173, %v1171
    %v1318 = vpack.c.b16 %v1174, %v1172
    %v1319 = vpack.c.b16 %v1177, %v1175
    %v1320 = vpack.c.b16 %v1178, %v1176
    %v1321 = vpack.c.b16 %v1181, %v1179
    %v1322 = vpack.c.b16 %v1182, %v1180
    %v1323 = vpack.c.b16 %v1185, %v1183
    %v1324 = vpack.c.b16 %v1186, %v1184
    %v1325 = vpack.c.b16 %v1189, %v1187
    %v1326 = vpack.c.b16 %v1190, %v1188
    %v1327 = vpack.c.b16 %v1193, %v1191
    %v1328 = vpack.c.b16 %v1194, %v1192
    %v1329 = vpack.c.b16 %v1197, %v1195
    %v1330 = vpack.c.b16 %v1198, %v1196
    %v1331 = vpack.c.b16 %v1201, %v1199
    %v1332 = vpack.c.b16 %v1202, %v1200
    %v1333 = vpack.c.b16 %v1205, %v1203
    %v1334 = vpack.c.b16 %v1206, %v1204
    %v1335 = vpack.c.b16 %v1209, %v1207
    %v1336 = vpack.c.b16 %v1210, %v1208
    %v1337 = vpack.c.b16 %v1213, %v1211
    %v1338 = vpack.c.b16 %v1214, %v1212
    %v1339 = vpack.c.b16 %v1217, %v1215
    %v1340 = vpack.c.b16 %v1218, %v1216
    %v1341 = vpack.c.b16 %v1221, %v1219
    %v1342 = vpack.c.b16 %v1222, %v1220
    %v1343 = vpack.c.b16 %v1225, %v1223
    %v1344 = vpack.c.b16 %v1226, %v1224
    %v1345 = vpack.c.b16 %v1229, %v1227
    %v1346 = vpack.c.b16 %v1230, %v1228
    %v1347 = vpack.c.b16 %v1233, %v1231
    %v1348 = vpack.c.b16 %v1234, %v1232
    %v1349 = vpack.c.b16 %v1237, %v1235
    %v1350 = vpack.c.b16 %v1238, %v1236
    %v1351 = vpack.c.b16 %v1241, %v1239
    %v1352 = vpack.c.b16 %v1242, %v1240
    %v1353 = vpack.c.b16 %v1245, %v1243
    %v1354 = vpack.c.b16 %v1246, %v1244
    %v1355 = vpack.c.b16 %v1249, %v1247
    %v1356 = vpack.c.b16 %v1250, %v1248
    %v1357 = vpack.c.b16 %v1253, %v1251
    %v1358 = vpack.c.b16 %v1254, %v1252
    %v1359 = vpack.c.b16 %v1257, %v1255
    %v1360 = vpack.c.b16 %v1258, %v1256
    %v1361 = vpack.c.b16 %v1261, %v1259
    %v1362 = vpack.c.b16 %v1262, %v1260
    %v1363 = vpack.c.b16 %v1265, %v1263
    %v1364 = vpack.c.b16 %v1266, %v1264
    %v1365 = vpack.c.b16 %v1269, %v1267
    %v1366 = vpack.c.b16 %v1270, %v1268
    %1463 = vmatprep.subr.bf16.mxu0 %v1286
    %1464 = vmatpush1.bf16.msra.mxu0 %v1285
    %1465 = vmatprep.subr.bf16.mxu0 %v1284
    %1466 = vmatpush1.bf16.msra.mxu0 %v1283
    %1467 = vmatprep.subr.bf16.mxu0 %v1282
    %1468 = vmatpush1.bf16.msra.mxu0 %v1281
    %1469 = vmatprep.subr.bf16.mxu0 %v1280
    %1470 = vmatpush1.bf16.msra.mxu0 %v1279
    %1471 = vmatprep.subr.bf16.mxu0 %v1278
    %1472 = vmatpush1.bf16.msra.mxu0 %v1277
    %1473 = vmatprep.subr.bf16.mxu0 %v1276
    %1474 = vmatpush1.bf16.msra.mxu0 %v1275
    %1475 = vmatprep.subr.bf16.mxu0 %v1274
    %1476 = vmatpush1.bf16.msra.mxu0 %v1273
    %1477 = vmatprep.subr.bf16.mxu0 %v1272
    %1478 = vmatpush1.bf16.msra.mxu0 %v1271
    %1479 = vmatprep.subr.bf16.mxu0 %v1302
    %1480 = vmatpush2.bf16.msra.mxu0 %v1301
    %1481 = vmatprep.subr.bf16.mxu0 %v1300
    %1482 = vmatpush2.bf16.msra.mxu0 %v1299
    %1483 = vmatprep.subr.bf16.mxu0 %v1298
    %1484 = vmatpush2.bf16.msra.mxu0 %v1297
    %1485 = vmatprep.subr.bf16.mxu0 %v1296
    %1486 = vmatpush2.bf16.msra.mxu0 %v1295
    %1487 = vmatprep.subr.bf16.mxu0 %v1294
    %1488 = vmatpush2.bf16.msra.mxu0 %v1293
    %1489 = vmatprep.subr.bf16.mxu0 %v1292
    %1490 = vmatpush2.bf16.msra.mxu0 %v1291
    %1491 = vmatprep.subr.bf16.mxu0 %v1290
    %1492 = vmatpush2.bf16.msra.mxu0 %v1289
    %1493 = vmatprep.subr.bf16.mxu0 %v1288
    %1494 = vmatpush2.bf16.msra.mxu0 %v1287
    %1495 = vmatprep.mubr.bf16.mxu0 %v972
    %1496 = vmatmul.mubr.bf16.gmra.mxu0 %v971
    %v1497 = vpop.f32.mrf.mxu0
    %v1498 = vadd.f32 %v955, %v1497
    %v1499 = vpop.f32.mrf.mxu0
    %v1500 = vadd.f32 %v959, %v1499
    %v1501 = vpop.f32.mrf.mxu0
    %v1502 = vpop.f32.mrf.mxu0
    %1503 = vdwg.mxu0
    %1504 = vmatprep.subr.bf16.mxu0 %v1318
    %1505 = vmatpush1.bf16.msra.mxu0 %v1317
    %1506 = vmatprep.subr.bf16.mxu0 %v1316
    %1507 = vmatpush1.bf16.msra.mxu0 %v1315
    %1508 = vmatprep.subr.bf16.mxu0 %v1314
    %1509 = vmatpush1.bf16.msra.mxu0 %v1313
    %1510 = vmatprep.subr.bf16.mxu0 %v1312
    %1511 = vmatpush1.bf16.msra.mxu0 %v1311
    %1512 = vmatprep.subr.bf16.mxu0 %v1310
    %1513 = vmatpush1.bf16.msra.mxu0 %v1309
    %1514 = vmatprep.subr.bf16.mxu0 %v1308
    %1515 = vmatpush1.bf16.msra.mxu0 %v1307
    %1516 = vmatprep.subr.bf16.mxu0 %v1306
    %1517 = vmatpush1.bf16.msra.mxu0 %v1305
    %1518 = vmatprep.subr.bf16.mxu0 %v1304
    %1519 = vmatpush1.bf16.msra.mxu0 %v1303
    %1520 = vmatprep.subr.bf16.mxu0 %v1334
    %1521 = vmatpush2.bf16.msra.mxu0 %v1333
    %1522 = vmatprep.subr.bf16.mxu0 %v1332
    %1523 = vmatpush2.bf16.msra.mxu0 %v1331
    %1524 = vmatprep.subr.bf16.mxu0 %v1330
    %1525 = vmatpush2.bf16.msra.mxu0 %v1329
    %1526 = vmatprep.subr.bf16.mxu0 %v1328
    %1527 = vmatpush2.bf16.msra.mxu0 %v1327
    %1528 = vmatprep.subr.bf16.mxu0 %v1326
    %1529 = vmatpush2.bf16.msra.mxu0 %v1325
    %1530 = vmatprep.subr.bf16.mxu0 %v1324
    %1531 = vmatpush2.bf16.msra.mxu0 %v1323
    %1532 = vmatprep.subr.bf16.mxu0 %v1322
    %1533 = vmatpush2.bf16.msra.mxu0 %v1321
    %1534 = vmatprep.subr.bf16.mxu0 %v1320
    %1535 = vmatpush2.bf16.msra.mxu0 %v1319
    %1536 = vmatprep.mubr.bf16.mxu0 %v974
    %1537 = vmatmul.mubr.bf16.gmra.mxu0 %v973
    %v1538 = vpop.f32.mrf.mxu0
    %v1539 = vadd.f32 %v1498, %v1538
    %v1540 = vpop.f32.mrf.mxu0
    %v1541 = vadd.f32 %v1500, %v1540
    %v1542 = vpop.f32.mrf.mxu0
    %v1543 = vpop.f32.mrf.mxu0
    %1544 = vdwg.mxu0
    %1545 = vmatprep.subr.bf16.mxu0 %v1350
    %1546 = vmatpush1.bf16.msra.mxu0 %v1349
    %1547 = vmatprep.subr.bf16.mxu0 %v1348
    %1548 = vmatpush1.bf16.msra.mxu0 %v1347
    %1549 = vmatprep.subr.bf16.mxu0 %v1346
    %1550 = vmatpush1.bf16.msra.mxu0 %v1345
    %1551 = vmatprep.subr.bf16.mxu0 %v1344
    %1552 = vmatpush1.bf16.msra.mxu0 %v1343
    %1553 = vmatprep.subr.bf16.mxu0 %v1342
    %1554 = vmatpush1.bf16.msra.mxu0 %v1341
    %1555 = vmatprep.subr.bf16.mxu0 %v1340
    %1556 = vmatpush1.bf16.msra.mxu0 %v1339
    %1557 = vmatprep.subr.bf16.mxu0 %v1338
    %1558 = vmatpush1.bf16.msra.mxu0 %v1337
    %1559 = vmatprep.subr.bf16.mxu0 %v1336
    %1560 = vmatpush1.bf16.msra.mxu0 %v1335
    %1561 = vmatprep.subr.bf16.mxu0 %v1366
    %1562 = vmatpush2.bf16.msra.mxu0 %v1365
    %1563 = vmatprep.subr.bf16.mxu0 %v1364
    %1564 = vmatpush2.bf16.msra.mxu0 %v1363
    %1565 = vmatprep.subr.bf16.mxu0 %v1362
    %1566 = vmatpush2.bf16.msra.mxu0 %v1361
    %1567 = vmatprep.subr.bf16.mxu0 %v1360
    %1568 = vmatpush2.bf16.msra.mxu0 %v1359
    %1569 = vmatprep.subr.bf16.mxu0 %v1358
    %1570 = vmatpush2.bf16.msra.mxu0 %v1357
    %1571 = vmatprep.subr.bf16.mxu0 %v1356
    %1572 = vmatpush2.bf16.msra.mxu0 %v1355
    %1573 = vmatprep.subr.bf16.mxu0 %v1354
    %1574 = vmatpush2.bf16.msra.mxu0 %v1353
    %1575 = vmatprep.subr.bf16.mxu0 %v1352
    %1576 = vmatpush2.bf16.msra.mxu0 %v1351
    %1577 = vmatprep.mubr.bf16.mxu0 %v976
    %1578 = vmatmul.mubr.bf16.gmra.mxu0 %v975
    %v1579 = vpop.f32.mrf.mxu0
    %v1580 = vadd.f32 %v1539, %v1579
    %v1581 = vpop.f32.mrf.mxu0
    %v1582 = vadd.f32 %v1541, %v1581
    %v1583 = vpop.f32.mrf.mxu0
    %v1584 = vpop.f32.mrf.mxu0
    %1585 = vdwg.mxu0
    %v1586 = vmax.f32 %v1580, 0.0
    %v1587 = vmax.f32 %v1582, 0.0
    %v1588 = vpack.c.bf16 %v1586, %v1586
    %v1589 = vpack.c.bf16 %v1587, %v1587
    %v1590 = vld [vmem:[#allocation10] sm:$0xff]
    %v1591 = vld [vmem:[#allocation10 + $0x8] sm:$0xff]
    %v1592 = vld [vmem:[#allocation10 + $0x10] sm:$0xff]
    %v1593 = vld [vmem:[#allocation10 + $0x18] sm:$0xff]
    %v1594 = vld [vmem:[#allocation10 + $0x20] sm:$0xff]
    %v1595 = vld [vmem:[#allocation10 + $0x28] sm:$0xff]
    %v1596 = vld [vmem:[#allocation10 + $0x30] sm:$0xff]
    %v1597 = vld [vmem:[#allocation10 + $0x38] sm:$0xff]
    %v1598 = vld [vmem:[#allocation10 + $0x40] sm:$0xff]
    %v1599 = vld [vmem:[#allocation10 + $0x48] sm:$0xff]
    %v1600 = vld [vmem:[#allocation10 + $0x50] sm:$0xff]
    %v1601 = vld [vmem:[#allocation10 + $0x58] sm:$0xff]
    %v1602 = vld [vmem:[#allocation10 + $0x60] sm:$0xff]
    %v1603 = vld [vmem:[#allocation10 + $0x68] sm:$0xff]
    %v1604 = vld [vmem:[#allocation10 + $0x70] sm:$0xff]
    %v1605 = vld [vmem:[#allocation10 + $0x78] sm:$0xff]
    %v1606 = vld [vmem:[#allocation10 + $0x80] sm:$0xff]
    %v1607 = vld [vmem:[#allocation10 + $0x88] sm:$0xff]
    %v1608 = vld [vmem:[#allocation10 + $0x90] sm:$0xff]
    %v1609 = vld [vmem:[#allocation10 + $0x98] sm:$0xff]
    %v1610 = vld [vmem:[#allocation10 + $0xa0] sm:$0xff]
    %v1611 = vld [vmem:[#allocation10 + $0xa8] sm:$0xff]
    %v1612 = vld [vmem:[#allocation10 + $0xb0] sm:$0xff]
    %v1613 = vld [vmem:[#allocation10 + $0xb8] sm:$0xff]
    %v1614 = vld [vmem:[#allocation10 + $0xc0] sm:$0xff]
    %v1615 = vld [vmem:[#allocation10 + $0xc8] sm:$0xff]
    %v1616 = vld [vmem:[#allocation10 + $0xd0] sm:$0xff]
    %v1617 = vld [vmem:[#allocation10 + $0xd8] sm:$0xff]
    %v1618 = vld [vmem:[#allocation10 + $0xe0] sm:$0xff]
    %v1619 = vld [vmem:[#allocation10 + $0xe8] sm:$0xff]
    %v1620 = vld [vmem:[#allocation10 + $0xf0] sm:$0xff]
    %v1621 = vld [vmem:[#allocation10 + $0xf8] sm:$0xff]
    %v1622 = vld [vmem:[#allocation10 + $0x100] sm:$0xff]
    %v1623 = vld [vmem:[#allocation10 + $0x108] sm:$0xff]
    %v1624 = vld [vmem:[#allocation10 + $0x110] sm:$0xff]
    %v1625 = vld [vmem:[#allocation10 + $0x118] sm:$0xff]
    %v1626 = vld [vmem:[#allocation10 + $0x120] sm:$0xff]
    %v1627 = vld [vmem:[#allocation10 + $0x128] sm:$0xff]
    %v1628 = vld [vmem:[#allocation10 + $0x130] sm:$0xff]
    %v1629 = vld [vmem:[#allocation10 + $0x138] sm:$0xff]
    %v1630 = vld [vmem:[#allocation10 + $0x140] sm:$0xff]
    %v1631 = vld [vmem:[#allocation10 + $0x148] sm:$0xff]
    %v1632 = vld [vmem:[#allocation10 + $0x150] sm:$0xff]
    %v1633 = vld [vmem:[#allocation10 + $0x158] sm:$0xff]
    %v1634 = vld [vmem:[#allocation10 + $0x160] sm:$0xff]
    %v1635 = vld [vmem:[#allocation10 + $0x168] sm:$0xff]
    %v1636 = vld [vmem:[#allocation10 + $0x170] sm:$0xff]
    %v1637 = vld [vmem:[#allocation10 + $0x178] sm:$0xff]
    %v1638 = vld [vmem:[#allocation10 + $0x180] sm:$0xff]
    %v1639 = vld [vmem:[#allocation10 + $0x188] sm:$0xff]
    %v1640 = vld [vmem:[#allocation10 + $0x190] sm:$0xff]
    %v1641 = vld [vmem:[#allocation10 + $0x198] sm:$0xff]
    %v1642 = vld [vmem:[#allocation10 + $0x1a0] sm:$0xff]
    %v1643 = vld [vmem:[#allocation10 + $0x1a8] sm:$0xff]
    %v1644 = vld [vmem:[#allocation10 + $0x1b0] sm:$0xff]
    %v1645 = vld [vmem:[#allocation10 + $0x1b8] sm:$0xff]
    %v1646 = vld [vmem:[#allocation10 + $0x1c0] sm:$0xff]
    %v1647 = vld [vmem:[#allocation10 + $0x1c8] sm:$0xff]
    %v1648 = vld [vmem:[#allocation10 + $0x1d0] sm:$0xff]
    %v1649 = vld [vmem:[#allocation10 + $0x1d8] sm:$0xff]
    %v1650 = vld [vmem:[#allocation10 + $0x1e0] sm:$0xff]
    %v1651 = vld [vmem:[#allocation10 + $0x1e8] sm:$0xff]
    %v1652 = vld [vmem:[#allocation10 + $0x1f0] sm:$0xff]
    %v1653 = vld [vmem:[#allocation10 + $0x1f8] sm:$0xff]
    %v1686 = vunpack.c.l.b16 %v1622
    %v1687 = vunpack.c.h.b16 %v1622
    %v1688 = vunpack.c.l.b16 %v1623
    %v1689 = vunpack.c.h.b16 %v1623
    %v1690 = vunpack.c.l.b16 %v1624
    %v1691 = vunpack.c.h.b16 %v1624
    %v1692 = vunpack.c.l.b16 %v1625
    %v1693 = vunpack.c.h.b16 %v1625
    %v1694 = vunpack.c.l.b16 %v1626
    %v1695 = vunpack.c.h.b16 %v1626
    %v1696 = vunpack.c.l.b16 %v1627
    %v1697 = vunpack.c.h.b16 %v1627
    %v1698 = vunpack.c.l.b16 %v1628
    %v1699 = vunpack.c.h.b16 %v1628
    %v1700 = vunpack.c.l.b16 %v1629
    %v1701 = vunpack.c.h.b16 %v1629
    %v1702 = vunpack.c.l.b16 %v1630
    %v1703 = vunpack.c.h.b16 %v1630
    %v1704 = vunpack.c.l.b16 %v1631
    %v1705 = vunpack.c.h.b16 %v1631
    %v1706 = vunpack.c.l.b16 %v1632
    %v1707 = vunpack.c.h.b16 %v1632
    %v1708 = vunpack.c.l.b16 %v1633
    %v1709 = vunpack.c.h.b16 %v1633
    %v1710 = vunpack.c.l.b16 %v1634
    %v1711 = vunpack.c.h.b16 %v1634
    %v1712 = vunpack.c.l.b16 %v1635
    %v1713 = vunpack.c.h.b16 %v1635
    %v1714 = vunpack.c.l.b16 %v1636
    %v1715 = vunpack.c.h.b16 %v1636
    %v1716 = vunpack.c.l.b16 %v1637
    %v1717 = vunpack.c.h.b16 %v1637
    %v1718 = vunpack.c.l.b16 %v1638
    %v1719 = vunpack.c.h.b16 %v1638
    %v1720 = vunpack.c.l.b16 %v1639
    %v1721 = vunpack.c.h.b16 %v1639
    %v1722 = vunpack.c.l.b16 %v1640
    %v1723 = vunpack.c.h.b16 %v1640
    %v1724 = vunpack.c.l.b16 %v1641
    %v1725 = vunpack.c.h.b16 %v1641
    %v1726 = vunpack.c.l.b16 %v1642
    %v1727 = vunpack.c.h.b16 %v1642
    %v1728 = vunpack.c.l.b16 %v1643
    %v1729 = vunpack.c.h.b16 %v1643
    %v1730 = vunpack.c.l.b16 %v1644
    %v1731 = vunpack.c.h.b16 %v1644
    %v1732 = vunpack.c.l.b16 %v1645
    %v1733 = vunpack.c.h.b16 %v1645
    %v1734 = vunpack.c.l.b16 %v1646
    %v1735 = vunpack.c.h.b16 %v1646
    %v1736 = vunpack.c.l.b16 %v1647
    %v1737 = vunpack.c.h.b16 %v1647
    %v1738 = vunpack.c.l.b16 %v1648
    %v1739 = vunpack.c.h.b16 %v1648
    %v1740 = vunpack.c.l.b16 %v1649
    %v1741 = vunpack.c.h.b16 %v1649
    %v1742 = vunpack.c.l.b16 %v1650
    %v1743 = vunpack.c.h.b16 %v1650
    %v1744 = vunpack.c.l.b16 %v1651
    %v1745 = vunpack.c.h.b16 %v1651
    %v1746 = vunpack.c.l.b16 %v1652
    %v1747 = vunpack.c.h.b16 %v1652
    %v1748 = vunpack.c.l.b16 %v1653
    %v1749 = vunpack.c.h.b16 %v1653
    %v1750 = vpack.c.b16 %v1688, %v1686
    %v1751 = vpack.c.b16 %v1689, %v1687
    %v1752 = vpack.c.b16 %v1692, %v1690
    %v1753 = vpack.c.b16 %v1693, %v1691
    %v1754 = vpack.c.b16 %v1696, %v1694
    %v1755 = vpack.c.b16 %v1697, %v1695
    %v1756 = vpack.c.b16 %v1700, %v1698
    %v1757 = vpack.c.b16 %v1701, %v1699
    %v1758 = vpack.c.b16 %v1704, %v1702
    %v1759 = vpack.c.b16 %v1705, %v1703
    %v1760 = vpack.c.b16 %v1708, %v1706
    %v1761 = vpack.c.b16 %v1709, %v1707
    %v1762 = vpack.c.b16 %v1712, %v1710
    %v1763 = vpack.c.b16 %v1713, %v1711
    %v1764 = vpack.c.b16 %v1716, %v1714
    %v1765 = vpack.c.b16 %v1717, %v1715
    %v1766 = vpack.c.b16 %v1720, %v1718
    %v1767 = vpack.c.b16 %v1721, %v1719
    %v1768 = vpack.c.b16 %v1724, %v1722
    %v1769 = vpack.c.b16 %v1725, %v1723
    %v1770 = vpack.c.b16 %v1728, %v1726
    %v1771 = vpack.c.b16 %v1729, %v1727
    %v1772 = vpack.c.b16 %v1732, %v1730
    %v1773 = vpack.c.b16 %v1733, %v1731
    %v1774 = vpack.c.b16 %v1736, %v1734
    %v1775 = vpack.c.b16 %v1737, %v1735
    %v1776 = vpack.c.b16 %v1740, %v1738
    %v1777 = vpack.c.b16 %v1741, %v1739
    %v1778 = vpack.c.b16 %v1744, %v1742
    %v1779 = vpack.c.b16 %v1745, %v1743
    %v1780 = vpack.c.b16 %v1748, %v1746
    %v1781 = vpack.c.b16 %v1749, %v1747
    %1814 = vmatprep.subr.bf16.mxu0 %v1765
    %1815 = vmatpush1.bf16.msra.mxu0 %v1764
    %1816 = vmatprep.subr.bf16.mxu0 %v1763
    %1817 = vmatpush1.bf16.msra.mxu0 %v1762
    %1818 = vmatprep.subr.bf16.mxu0 %v1761
    %1819 = vmatpush1.bf16.msra.mxu0 %v1760
    %1820 = vmatprep.subr.bf16.mxu0 %v1759
    %1821 = vmatpush1.bf16.msra.mxu0 %v1758
    %1822 = vmatprep.subr.bf16.mxu0 %v1757
    %1823 = vmatpush1.bf16.msra.mxu0 %v1756
    %1824 = vmatprep.subr.bf16.mxu0 %v1755
    %1825 = vmatpush1.bf16.msra.mxu0 %v1754
    %1826 = vmatprep.subr.bf16.mxu0 %v1753
    %1827 = vmatpush1.bf16.msra.mxu0 %v1752
    %1828 = vmatprep.subr.bf16.mxu0 %v1751
    %1829 = vmatpush1.bf16.msra.mxu0 %v1750
    %1830 = vmatprep.subr.bf16.mxu0 %v1781
    %1831 = vmatpush2.bf16.msra.mxu0 %v1780
    %1832 = vmatprep.subr.bf16.mxu0 %v1779
    %1833 = vmatpush2.bf16.msra.mxu0 %v1778
    %1834 = vmatprep.subr.bf16.mxu0 %v1777
    %1835 = vmatpush2.bf16.msra.mxu0 %v1776
    %1836 = vmatprep.subr.bf16.mxu0 %v1775
    %1837 = vmatpush2.bf16.msra.mxu0 %v1774
    %1838 = vmatprep.subr.bf16.mxu0 %v1773
    %1839 = vmatpush2.bf16.msra.mxu0 %v1772
    %1840 = vmatprep.subr.bf16.mxu0 %v1771
    %1841 = vmatpush2.bf16.msra.mxu0 %v1770
    %1842 = vmatprep.subr.bf16.mxu0 %v1769
    %1843 = vmatpush2.bf16.msra.mxu0 %v1768
    %1844 = vmatprep.subr.bf16.mxu0 %v1767
    %1845 = vmatpush2.bf16.msra.mxu0 %v1766
    %1846 = vmatprep.mubr.bf16.mxu0 %v1589
    %1847 = vmatmul.mubr.bf16.gmra.mxu0 %v1588
    %v1848 = vpop.f32.mrf.mxu0
    %v1849 = vadd.f32 0.0, %v1848
    %v1850 = vpop.f32.mrf.mxu0
    %v1851 = vadd.f32 0.0, %v1850
    %v1852 = vpop.f32.mrf.mxu0
    %v1853 = vpop.f32.mrf.mxu0
    %1854 = vdwg.mxu0
    %v1887 = vunpack.c.l.b16 %v1590
    %v1888 = vunpack.c.h.b16 %v1590
    %v1889 = vunpack.c.l.b16 %v1591
    %v1890 = vunpack.c.h.b16 %v1591
    %v1891 = vunpack.c.l.b16 %v1592
    %v1892 = vunpack.c.h.b16 %v1592
    %v1893 = vunpack.c.l.b16 %v1593
    %v1894 = vunpack.c.h.b16 %v1593
    %v1895 = vunpack.c.l.b16 %v1594
    %v1896 = vunpack.c.h.b16 %v1594
    %v1897 = vunpack.c.l.b16 %v1595
    %v1898 = vunpack.c.h.b16 %v1595
    %v1899 = vunpack.c.l.b16 %v1596
    %v1900 = vunpack.c.h.b16 %v1596
    %v1901 = vunpack.c.l.b16 %v1597
    %v1902 = vunpack.c.h.b16 %v1597
    %v1903 = vunpack.c.l.b16 %v1598
    %v1904 = vunpack.c.h.b16 %v1598
    %v1905 = vunpack.c.l.b16 %v1599
    %v1906 = vunpack.c.h.b16 %v1599
    %v1907 = vunpack.c.l.b16 %v1600
    %v1908 = vunpack.c.h.b16 %v1600
    %v1909 = vunpack.c.l.b16 %v1601
    %v1910 = vunpack.c.h.b16 %v1601
    %v1911 = vunpack.c.l.b16 %v1602
    %v1912 = vunpack.c.h.b16 %v1602
    %v1913 = vunpack.c.l.b16 %v1603
    %v1914 = vunpack.c.h.b16 %v1603
    %v1915 = vunpack.c.l.b16 %v1604
    %v1916 = vunpack.c.h.b16 %v1604
    %v1917 = vunpack.c.l.b16 %v1605
    %v1918 = vunpack.c.h.b16 %v1605
    %v1919 = vunpack.c.l.b16 %v1606
    %v1920 = vunpack.c.h.b16 %v1606
    %v1921 = vunpack.c.l.b16 %v1607
    %v1922 = vunpack.c.h.b16 %v1607
    %v1923 = vunpack.c.l.b16 %v1608
    %v1924 = vunpack.c.h.b16 %v1608
    %v1925 = vunpack.c.l.b16 %v1609
    %v1926 = vunpack.c.h.b16 %v1609
    %v1927 = vunpack.c.l.b16 %v1610
    %v1928 = vunpack.c.h.b16 %v1610
    %v1929 = vunpack.c.l.b16 %v1611
    %v1930 = vunpack.c.h.b16 %v1611
    %v1931 = vunpack.c.l.b16 %v1612
    %v1932 = vunpack.c.h.b16 %v1612
    %v1933 = vunpack.c.l.b16 %v1613
    %v1934 = vunpack.c.h.b16 %v1613
    %v1935 = vunpack.c.l.b16 %v1614
    %v1936 = vunpack.c.h.b16 %v1614
    %v1937 = vunpack.c.l.b16 %v1615
    %v1938 = vunpack.c.h.b16 %v1615
    %v1939 = vunpack.c.l.b16 %v1616
    %v1940 = vunpack.c.h.b16 %v1616
    %v1941 = vunpack.c.l.b16 %v1617
    %v1942 = vunpack.c.h.b16 %v1617
    %v1943 = vunpack.c.l.b16 %v1618
    %v1944 = vunpack.c.h.b16 %v1618
    %v1945 = vunpack.c.l.b16 %v1619
    %v1946 = vunpack.c.h.b16 %v1619
    %v1947 = vunpack.c.l.b16 %v1620
    %v1948 = vunpack.c.h.b16 %v1620
    %v1949 = vunpack.c.l.b16 %v1621
    %v1950 = vunpack.c.h.b16 %v1621
    %v1951 = vpack.c.b16 %v1889, %v1887
    %v1952 = vpack.c.b16 %v1890, %v1888
    %v1953 = vpack.c.b16 %v1893, %v1891
    %v1954 = vpack.c.b16 %v1894, %v1892
    %v1955 = vpack.c.b16 %v1897, %v1895
    %v1956 = vpack.c.b16 %v1898, %v1896
    %v1957 = vpack.c.b16 %v1901, %v1899
    %v1958 = vpack.c.b16 %v1902, %v1900
    %v1959 = vpack.c.b16 %v1905, %v1903
    %v1960 = vpack.c.b16 %v1906, %v1904
    %v1961 = vpack.c.b16 %v1909, %v1907
    %v1962 = vpack.c.b16 %v1910, %v1908
    %v1963 = vpack.c.b16 %v1913, %v1911
    %v1964 = vpack.c.b16 %v1914, %v1912
    %v1965 = vpack.c.b16 %v1917, %v1915
    %v1966 = vpack.c.b16 %v1918, %v1916
    %v1967 = vpack.c.b16 %v1921, %v1919
    %v1968 = vpack.c.b16 %v1922, %v1920
    %v1969 = vpack.c.b16 %v1925, %v1923
    %v1970 = vpack.c.b16 %v1926, %v1924
    %v1971 = vpack.c.b16 %v1929, %v1927
    %v1972 = vpack.c.b16 %v1930, %v1928
    %v1973 = vpack.c.b16 %v1933, %v1931
    %v1974 = vpack.c.b16 %v1934, %v1932
    %v1975 = vpack.c.b16 %v1937, %v1935
    %v1976 = vpack.c.b16 %v1938, %v1936
    %v1977 = vpack.c.b16 %v1941, %v1939
    %v1978 = vpack.c.b16 %v1942, %v1940
    %v1979 = vpack.c.b16 %v1945, %v1943
    %v1980 = vpack.c.b16 %v1946, %v1944
    %v1981 = vpack.c.b16 %v1949, %v1947
    %v1982 = vpack.c.b16 %v1950, %v1948
    %2015 = vmatprep.subr.bf16.mxu0 %v1966
    %2016 = vmatpush1.bf16.msra.mxu0 %v1965
    %2017 = vmatprep.subr.bf16.mxu0 %v1964
    %2018 = vmatpush1.bf16.msra.mxu0 %v1963
    %2019 = vmatprep.subr.bf16.mxu0 %v1962
    %2020 = vmatpush1.bf16.msra.mxu0 %v1961
    %2021 = vmatprep.subr.bf16.mxu0 %v1960
    %2022 = vmatpush1.bf16.msra.mxu0 %v1959
    %2023 = vmatprep.subr.bf16.mxu0 %v1958
    %2024 = vmatpush1.bf16.msra.mxu0 %v1957
    %2025 = vmatprep.subr.bf16.mxu0 %v1956
    %2026 = vmatpush1.bf16.msra.mxu0 %v1955
    %2027 = vmatprep.subr.bf16.mxu0 %v1954
    %2028 = vmatpush1.bf16.msra.mxu0 %v1953
    %2029 = vmatprep.subr.bf16.mxu0 %v1952
    %2030 = vmatpush1.bf16.msra.mxu0 %v1951
    %2031 = vmatprep.subr.bf16.mxu0 %v1982
    %2032 = vmatpush2.bf16.msra.mxu0 %v1981
    %2033 = vmatprep.subr.bf16.mxu0 %v1980
    %2034 = vmatpush2.bf16.msra.mxu0 %v1979
    %2035 = vmatprep.subr.bf16.mxu0 %v1978
    %2036 = vmatpush2.bf16.msra.mxu0 %v1977
    %2037 = vmatprep.subr.bf16.mxu0 %v1976
    %2038 = vmatpush2.bf16.msra.mxu0 %v1975
    %2039 = vmatprep.subr.bf16.mxu0 %v1974
    %2040 = vmatpush2.bf16.msra.mxu0 %v1973
    %2041 = vmatprep.subr.bf16.mxu0 %v1972
    %2042 = vmatpush2.bf16.msra.mxu0 %v1971
    %2043 = vmatprep.subr.bf16.mxu0 %v1970
    %2044 = vmatpush2.bf16.msra.mxu0 %v1969
    %2045 = vmatprep.subr.bf16.mxu0 %v1968
    %2046 = vmatpush2.bf16.msra.mxu0 %v1967
    %2047 = vmatprep.mubr.bf16.mxu0 %v854
    %2048 = vmatmul.mubr.bf16.gmra.mxu0 %v853
    %v2049 = vpop.f32.mrf.mxu0
    %v2050 = vadd.f32 %v1849, %v2049
    %v2051 = vpop.f32.mrf.mxu0
    %v2052 = vadd.f32 %v1851, %v2051
    %v2053 = vpop.f32.mrf.mxu0
    %v2054 = vpop.f32.mrf.mxu0
    %2055 = vdwg.mxu0
    %v2057 = vlaneseq
    %v2058 = vshrl.u32 %v2057, 7
    %v2059 = vsub.s32 0, %v2058
    %v2060 = vrot.slane %v117, %v2059
    %v2061 = vlaneseq
    %v2062 = vshrl.u32 %v2061, 7
    %v2063 = vsub.s32 1, %v2062
    %v2064 = vrot.slane %v117, %v2063
    %v2067 = vadd.f32 %v2050, %v2060
    %v2068 = vadd.f32 %v2052, %v2064
    %v2069 = vmax.f32 %v2067, 0.0
    %v2070 = vmax.f32 %v2068, 0.0
    %v2071 = vpack.c.bf16 %v2069, %v2069
    %v2072 = vpack.c.bf16 %v2070, %v2070
    %v2073 = vld [vmem:[#allocation11] sm:$0xf]
    %v2074 = vld [vmem:[#allocation11 + $0x4] sm:$0xf]
    %v2075 = vld [vmem:[#allocation11 + $0x8] sm:$0xf]
    %v2076 = vld [vmem:[#allocation11 + $0xc] sm:$0xf]
    %v2077 = vld [vmem:[#allocation11 + $0x10] sm:$0xf]
    %v2078 = vld [vmem:[#allocation11 + $0x14] sm:$0xf]
    %v2079 = vld [vmem:[#allocation11 + $0x18] sm:$0xf]
    %v2080 = vld [vmem:[#allocation11 + $0x1c] sm:$0xf]
    %v2081 = vld [vmem:[#allocation11 + $0x20] sm:$0xf]
    %v2082 = vld [vmem:[#allocation11 + $0x24] sm:$0xf]
    %v2083 = vld [vmem:[#allocation11 + $0x28] sm:$0xf]
    %v2084 = vld [vmem:[#allocation11 + $0x2c] sm:$0xf]
    %v2085 = vld [vmem:[#allocation11 + $0x30] sm:$0xf]
    %v2086 = vld [vmem:[#allocation11 + $0x34] sm:$0xf]
    %v2087 = vld [vmem:[#allocation11 + $0x38] sm:$0xf]
    %v2088 = vld [vmem:[#allocation11 + $0x3c] sm:$0xf]
    %v2089 = vld [vmem:[#allocation11 + $0x40] sm:$0xf]
    %v2090 = vld [vmem:[#allocation11 + $0x44] sm:$0xf]
    %v2091 = vld [vmem:[#allocation11 + $0x48] sm:$0xf]
    %v2092 = vld [vmem:[#allocation11 + $0x4c] sm:$0xf]
    %v2093 = vld [vmem:[#allocation11 + $0x50] sm:$0xf]
    %v2094 = vld [vmem:[#allocation11 + $0x54] sm:$0xf]
    %v2095 = vld [vmem:[#allocation11 + $0x58] sm:$0xf]
    %v2096 = vld [vmem:[#allocation11 + $0x5c] sm:$0xf]
    %v2097 = vld [vmem:[#allocation11 + $0x60] sm:$0xf]
    %v2098 = vld [vmem:[#allocation11 + $0x64] sm:$0xf]
    %v2099 = vld [vmem:[#allocation11 + $0x68] sm:$0xf]
    %v2100 = vld [vmem:[#allocation11 + $0x6c] sm:$0xf]
    %v2101 = vld [vmem:[#allocation11 + $0x70] sm:$0xf]
    %v2102 = vld [vmem:[#allocation11 + $0x74] sm:$0xf]
    %v2103 = vld [vmem:[#allocation11 + $0x78] sm:$0xf]
    %v2104 = vld [vmem:[#allocation11 + $0x7c] sm:$0xf]
    %v2106 = vlaneseq
    %v2107 = vshrl.u32 %v2106, 7
    %v2108 = vsub.s32 0, %v2107
    %v2109 = vrot.slane %v118, %v2108
    %v2143 = vunpack.c.l.b16 %v2073
    %v2144 = vunpack.c.l.b16 %v2074
    %v2145 = vunpack.c.l.b16 %v2075
    %v2146 = vunpack.c.l.b16 %v2076
    %v2147 = vunpack.c.l.b16 %v2077
    %v2148 = vunpack.c.l.b16 %v2078
    %v2149 = vunpack.c.l.b16 %v2079
    %v2150 = vunpack.c.l.b16 %v2080
    %v2151 = vunpack.c.l.b16 %v2081
    %v2152 = vunpack.c.l.b16 %v2082
    %v2153 = vunpack.c.l.b16 %v2083
    %v2154 = vunpack.c.l.b16 %v2084
    %v2155 = vunpack.c.l.b16 %v2085
    %v2156 = vunpack.c.l.b16 %v2086
    %v2157 = vunpack.c.l.b16 %v2087
    %v2158 = vunpack.c.l.b16 %v2088
    %v2159 = vunpack.c.l.b16 %v2089
    %v2160 = vunpack.c.l.b16 %v2090
    %v2161 = vunpack.c.l.b16 %v2091
    %v2162 = vunpack.c.l.b16 %v2092
    %v2163 = vunpack.c.l.b16 %v2093
    %v2164 = vunpack.c.l.b16 %v2094
    %v2165 = vunpack.c.l.b16 %v2095
    %v2166 = vunpack.c.l.b16 %v2096
    %v2167 = vunpack.c.l.b16 %v2097
    %v2168 = vunpack.c.l.b16 %v2098
    %v2169 = vunpack.c.l.b16 %v2099
    %v2170 = vunpack.c.l.b16 %v2100
    %v2171 = vunpack.c.l.b16 %v2101
    %v2172 = vunpack.c.l.b16 %v2102
    %v2173 = vunpack.c.l.b16 %v2103
    %v2174 = vunpack.c.l.b16 %v2104
    %v2175 = vpack.c.b16 %v2144, %v2143
    %v2176 = vpack.c.b16 %v2146, %v2145
    %v2177 = vpack.c.b16 %v2148, %v2147
    %v2178 = vpack.c.b16 %v2150, %v2149
    %v2179 = vpack.c.b16 %v2152, %v2151
    %v2180 = vpack.c.b16 %v2154, %v2153
    %v2181 = vpack.c.b16 %v2156, %v2155
    %v2182 = vpack.c.b16 %v2158, %v2157
    %v2183 = vpack.c.b16 %v2160, %v2159
    %v2184 = vpack.c.b16 %v2162, %v2161
    %v2185 = vpack.c.b16 %v2164, %v2163
    %v2186 = vpack.c.b16 %v2166, %v2165
    %v2187 = vpack.c.b16 %v2168, %v2167
    %v2188 = vpack.c.b16 %v2170, %v2169
    %v2189 = vpack.c.b16 %v2172, %v2171
    %v2190 = vpack.c.b16 %v2174, %v2173
    %2207 = vmatprep.subr.bf16.mxu0 0
    %2208 = vmatpush1.bf16.msra.mxu0 %v2182
    %2209 = vmatprep.subr.bf16.mxu0 0
    %2210 = vmatpush1.bf16.msra.mxu0 %v2181
    %2211 = vmatprep.subr.bf16.mxu0 0
    %2212 = vmatpush1.bf16.msra.mxu0 %v2180
    %2213 = vmatprep.subr.bf16.mxu0 0
    %2214 = vmatpush1.bf16.msra.mxu0 %v2179
    %2215 = vmatprep.subr.bf16.mxu0 0
    %2216 = vmatpush1.bf16.msra.mxu0 %v2178
    %2217 = vmatprep.subr.bf16.mxu0 0
    %2218 = vmatpush1.bf16.msra.mxu0 %v2177
    %2219 = vmatprep.subr.bf16.mxu0 0
    %2220 = vmatpush1.bf16.msra.mxu0 %v2176
    %2221 = vmatprep.subr.bf16.mxu0 0
    %2222 = vmatpush1.bf16.msra.mxu0 %v2175
    %2223 = vmatprep.subr.bf16.mxu0 0
    %2224 = vmatpush2.bf16.msra.mxu0 %v2190
    %2225 = vmatprep.subr.bf16.mxu0 0
    %2226 = vmatpush2.bf16.msra.mxu0 %v2189
    %2227 = vmatprep.subr.bf16.mxu0 0
    %2228 = vmatpush2.bf16.msra.mxu0 %v2188
    %2229 = vmatprep.subr.bf16.mxu0 0
    %2230 = vmatpush2.bf16.msra.mxu0 %v2187
    %2231 = vmatprep.subr.bf16.mxu0 0
    %2232 = vmatpush2.bf16.msra.mxu0 %v2186
    %2233 = vmatprep.subr.bf16.mxu0 0
    %2234 = vmatpush2.bf16.msra.mxu0 %v2185
    %2235 = vmatprep.subr.bf16.mxu0 0
    %2236 = vmatpush2.bf16.msra.mxu0 %v2184
    %2237 = vmatprep.subr.bf16.mxu0 0
    %2238 = vmatpush2.bf16.msra.mxu0 %v2183
    %2239 = vmatprep.mubr.bf16.mxu0 %v2072
    %2240 = vmatmul.mubr.bf16.gmra.mxu0 %v2071
    %v2241 = vpop.f32.mrf.mxu0
    %v2242 = vadd.f32 %v2109, %v2241
    %v2243 = vpop.f32.mrf.mxu0
    %v2244 = vpop.f32.mrf.mxu0
    %v2245 = vpop.f32.mrf.mxu0
    %2246 = vdwg.mxu0
    %v2247 = vmax.f32 %v2242, 0.0
    %v2248 = vpack.c.bf16 %v2247, %v2247
    %v2249 = vld [vmem:[%s6] sm:$0x1]
    %2251 = vset.pattern.permute.xlu0 0
    %2252 = vperm.xlu0 %2251, %v119
    %v2253 = vpop.permute.xlu0 %2252
    %v2255 = vlaneseq
    %v2256 = vshrl.u32 %v2255, 7
    %v2257 = vsub.s32 0, %v2256
    %v2258 = vrot.slane %v2253, %v2257
    %2259 = vmatprep.subr.bf16.mxu0 0
    %2260 = vmatpush1.bf16.xpose.msra.mxu0 0
    %2261 = vmatprep.subr.bf16.mxu0 0
    %2262 = vmatpush1.bf16.xpose.msra.mxu0 0
    %2263 = vmatprep.subr.bf16.mxu0 0
    %2264 = vmatpush1.bf16.xpose.msra.mxu0 0
    %2265 = vmatprep.subr.bf16.mxu0 0
    %2266 = vmatpush1.bf16.xpose.msra.mxu0 0
    %2267 = vmatprep.subr.bf16.mxu0 0
    %2268 = vmatpush1.bf16.xpose.msra.mxu0 0
    %2269 = vmatprep.subr.bf16.mxu0 0
    %2270 = vmatpush1.bf16.xpose.msra.mxu0 0
    %2271 = vmatprep.subr.bf16.mxu0 0
    %2272 = vmatpush1.bf16.xpose.msra.mxu0 0
    %2273 = vmatprep.subr.bf16.mxu0 0
    %2274 = vmatpush1.bf16.xpose.msra.mxu0 %v2248
    %2275 = vmatprep.subr.bf16.mxu0 0
    %2276 = vmatpush2.bf16.xpose.msra.mxu0 0
    %2277 = vmatprep.subr.bf16.mxu0 0
    %2278 = vmatpush2.bf16.xpose.msra.mxu0 0
    %2279 = vmatprep.subr.bf16.mxu0 0
    %2280 = vmatpush2.bf16.xpose.msra.mxu0 0
    %2281 = vmatprep.subr.bf16.mxu0 0
    %2282 = vmatpush2.bf16.xpose.msra.mxu0 0
    %2283 = vmatprep.subr.bf16.mxu0 0
    %2284 = vmatpush2.bf16.xpose.msra.mxu0 0
    %2285 = vmatprep.subr.bf16.mxu0 0
    %2286 = vmatpush2.bf16.xpose.msra.mxu0 0
    %2287 = vmatprep.subr.bf16.mxu0 0
    %2288 = vmatpush2.bf16.xpose.msra.mxu0 0
    %2289 = vmatprep.subr.bf16.mxu0 0
    %2290 = vmatpush2.bf16.xpose.msra.mxu0 0
    %2291 = vmatprep.mubr.bf16.mxu0 0
    %2292 = vmatmul.mubr.bf16.gmra.mxu0 %v2249
    %v2293 = vpop.f32.mrf.mxu0
    %v2294 = vadd.f32 %v2258, %v2293
    %v2295 = vpop.f32.mrf.mxu0
    %v2296 = vpop.f32.mrf.mxu0
    %v2297 = vpop.f32.mrf.mxu0
    %2298 = vdwg.mxu0
    %vm2299 = vcmask 57344
    %2300 = vst.msk [vmem:[#allocation13] sm:$0x1] %vm2299, %v2294
    // Predicated region
    $region58: #{function_classifier.1} parent=1 // pred_check
      _
    $region59: #{function_classifier.1} parent=1 // pred_check_branch
      %2302 = sbr.rel (0) target = $region61
    $region60: #{function_classifier.1} parent=1 // pred_region
      %s2304 = ssub.s32 16, 16
      %2305 = vsyncadd [#allocation4], %s2304
      %s2307 = sshll.u32 [#allocation13], 4
      %s2308 = int_to_ptr.vmem [resolvable:$true] %s2307
      %2310 = dma.vmem_to_hbm [thread:$0]  %s2308, 16, %s8, [#allocation4]
    $region61: #{function_classifier.1} parent=1 // pred_fallthru
      _
    // Predicated region
    $region62: #{function_classifier.1} parent=1 // pred_check
      _
    $region63: #{function_classifier.1} parent=1 // pred_check_branch
      %2312 = sbr.rel (0) target = $region65
    $region64: #{function_classifier.1} parent=1 // pred_region
      %2313 = dma.done [#allocation4], 16
    $region65: #{function_classifier.1} parent=1 // pred_fallthru
      _
    %2314 = vsyncpa [#allocation3], 1
    %2315 = vsyncpa [#allocation6], 1
    %2316 = vsyncpa [#allocation9], 1
    %2317 = vsyncpa [#allocation12], 1
    %2318 = vsyncpa [#allocation4], 1

</llo_original>
